<compile_context>
chip_gen: v7x
topology: tpu7x:2x2x1
jax: 0.10.0
libtpu: 0.0.40
codegen_flags: <defaults>
</compile_context>

<pallas_src>
import functools

import jax
import jax.numpy as jnp
from jax.experimental import pallas as pl
from jax.experimental.pallas import tpu as pltpu


# ------------------------------ Pallas kernel -------------------------------

def _depthconv1d_kernel(
    x_ref,             # (1, Cin, T)        input block (one batch element)
    w1_ref, b1_ref,    # (H, Cin), (H, 1)   1x1 conv Cin -> H
    a1_ref,            # (1, 1)             PReLU #1 (single shared parameter)
    g1_ref, be1_ref,   # (H, 1), (H, 1)     GroupNorm(1, H) #1 affine
    wd_ref, bd_ref,    # (H, K), (H, 1)     depthwise conv (groups = H)
    a2_ref,            # (1, 1)             PReLU #2
    g2_ref, be2_ref,   # (H, 1), (H, 1)     GroupNorm(1, H) #2 affine
    wrs_ref, brs_ref,  # (2*Cin, H), (2*Cin, 1)  fused residual|skip 1x1 conv
    res_ref,           # (1, Cin, L_out)    output
    skip_ref,          # (1, Cin, L_out)    output
    pad_scratch,       # VMEM (H, T + 2*pad) zero-padded depthwise input
    *, kernel, dilation, pad, eps,
):
    x = x_ref[0]                                   # (Cin, T)
    Cin, T = x.shape
    H = w1_ref.shape[0]
    L_out = T + 2 * pad - dilation * (kernel - 1)

    # ---- 1x1 conv (MXU, f32 acc) + bias + PReLU -----------------------------
    h = jnp.dot(w1_ref[...], x, preferred_element_type=jnp.float32)
    h = h + b1_ref[...]                            # (H, T)
    h = jnp.where(h >= 0.0, h, a1_ref[...] * h)

    # ---- GroupNorm(1, H): single-pass stats, affine folded into one FMA -----
    inv_n1 = 1.0 / float(H * T)
    s1 = jnp.sum(h)                                # independent reductions
    s2 = jnp.sum(h * h)
    mean1 = s1 * inv_n1
    var1 = s2 * inv_n1 - mean1 * mean1
    scale1 = g1_ref[...] * jax.lax.rsqrt(var1 + eps)     # (H, 1)
    shift1 = be1_ref[...] - mean1 * scale1                # (H, 1)
    h = h * scale1 + shift1

    # ---- depthwise conv: k shifted MACs against a padded VMEM slab ----------
    # Only the 2*pad border columns are zeroed; the interior is overwritten.
    if pad > 0:
        pad_scratch[:, :pad] = jnp.zeros((H, pad), jnp.float32)
        pad_scratch[:, pad + T:] = jnp.zeros((H, pad), jnp.float32)
    pad_scratch[:, pad:pad + T] = h
    wd = wd_ref[...]                               # (H, K)
    acc = wd[:, 0:1] * pad_scratch[:, 0:L_out]     # tap 0 initializes acc
    for j in range(1, kernel):                     # static, tiny trip count
        off = j * dilation
        acc = acc + wd[:, j:j + 1] * pad_scratch[:, off:off + L_out]
    acc = acc + bd_ref[...]

    # ---- PReLU + GroupNorm(1, H) --------------------------------------------
    o = jnp.where(acc >= 0.0, acc, a2_ref[...] * acc)
    inv_n2 = 1.0 / float(H * L_out)
    t1 = jnp.sum(o)
    t2 = jnp.sum(o * o)
    mean2 = t1 * inv_n2
    var2 = t2 * inv_n2 - mean2 * mean2
    scale2 = g2_ref[...] * jax.lax.rsqrt(var2 + eps)
    shift2 = be2_ref[...] - mean2 * scale2
    o = o * scale2 + shift2

    # ---- fused residual+skip 1x1 conv: one (2*Cin, H) MXU matmul ------------
    out = (jnp.dot(wrs_ref[...], o, preferred_element_type=jnp.float32)
           + brs_ref[...])                         # (2*Cin, L_out)
    res_ref[0] = out[:Cin].astype(res_ref.dtype)
    skip_ref[0] = out[Cin:2 * Cin].astype(skip_ref.dtype)


# ------------------------------ wrapper --------------------------------------

@functools.partial(jax.jit,
                   static_argnames=("kernel", "dilation", "padding", "eps"))
def depth_conv1d_forward(x, w1, b1, a1, g1, be1, wd, bd, a2, g2, be2,
                         wr, br, ws, bs, *, kernel, dilation, padding,
                         eps=1e-8):
    """Fused DepthConv1d forward (causal=False, skip=True).

    x: (B, Cin, T) float32. Parameters use PyTorch layouts:
      w1 (H, Cin, 1), b1 (H,); PReLU a (1,); GroupNorm gamma/beta (H,);
      wd (H, 1, K), bd (H,); wr/ws (Cin, H, 1), br/bs (Cin,).
    Returns (residual, skip), each (B, Cin, L_out),
      L_out = T + 2*padding - dilation*(kernel-1).
    """
    B, Cin, T = x.shape
    H = w1.shape[0]
    L_out = T + 2 * padding - dilation * (kernel - 1)
    T_pad = T + 2 * padding
    f32 = jnp.float32

    col = lambda v: v.reshape(v.shape[0], 1).astype(f32)
    w1_2d = w1.reshape(H, Cin).astype(f32)
    wd_2d = wd.reshape(H, kernel).astype(f32)
    # Fuse residual / skip weights into one (2*Cin, H) matmul operand.
    wrs_2d = jnp.concatenate(
        [wr.reshape(Cin, H).astype(f32), ws.reshape(Cin, H).astype(f32)], axis=0)
    brs_col = jnp.concatenate([col(br), col(bs)], axis=0)   # (2*Cin, 1)

    kern = functools.partial(_depthconv1d_kernel, kernel=kernel,
                             dilation=dilation, pad=padding, eps=eps)

    def const_spec(shape):
        return pl.BlockSpec(shape, lambda b: (0,) * len(shape))

    # Explicit VMEM budget: double-buffered input / output blocks, the padded
    # scratch, live intermediates (h / acc / o), and the constant weights.
    resident_f32 = (
        2 * Cin * T                       # double-buffered x block
        + 2 * 2 * Cin * L_out             # two double-buffered output blocks
        + H * T_pad                       # pad_scratch
        + 6 * H * max(T, L_out)           # live h / acc / o + slack
        + 2 * (H * Cin + 2 * Cin * H + H * kernel + 8 * H)  # weights
    )
    vmem_limit = int(min(max(resident_f32 * 4 + (4 << 20), 32 << 20), 100 << 20))

    residual, skip = pl.pallas_call(
        kern,
        out_shape=(
            jax.ShapeDtypeStruct((B, Cin, L_out), f32),
            jax.ShapeDtypeStruct((B, Cin, L_out), f32),
        ),
        grid=(B,),
        in_specs=[
            pl.BlockSpec((1, Cin, T), lambda b: (b, 0, 0)),   # x
            const_spec((H, Cin)), const_spec((H, 1)),         # w1, b1
            const_spec((1, 1)),                               # a1
            const_spec((H, 1)), const_spec((H, 1)),           # g1, be1
            const_spec((H, kernel)), const_spec((H, 1)),      # wd, bd
            const_spec((1, 1)),                               # a2
            const_spec((H, 1)), const_spec((H, 1)),           # g2, be2
            const_spec((2 * Cin, H)), const_spec((2 * Cin, 1)),  # wrs, brs
        ],
        out_specs=(
            pl.BlockSpec((1, Cin, L_out), lambda b: (b, 0, 0)),
            pl.BlockSpec((1, Cin, L_out), lambda b: (b, 0, 0)),
        ),
        scratch_shapes=[pltpu.VMEM((H, T_pad), f32)],
        compiler_params=pltpu.CompilerParams(
            dimension_semantics=("parallel",),
            vmem_limit_bytes=vmem_limit),
    )(x.astype(f32), w1_2d, col(b1), a1.reshape(1, 1).astype(f32),
      col(g1), col(be1), wd_2d, col(bd), a2.reshape(1, 1).astype(f32),
      col(g2), col(be2), wrs_2d, brs_col)
    return residual, skip


# --------------------------- pure-JAX reference ------------------------------

def _ref_depth_conv1d(x, w1, b1, a1, g1, be1, wd, bd, a2, g2, be2,
                      wr, br, ws, bs, *, kernel, dilation, padding, eps):
    hp = jax.lax.Precision.HIGHEST

    def conv1x1(z, w, b):
        return (jnp.einsum("oi,bit->bot", w[:, :, 0], z, precision=hp)
                + b[None, :, None])

    def prelu(z, a):
        return jnp.where(z >= 0.0, z, a.reshape(()) * z)

    def gln(z, g, be):   # GroupNorm(1, C): normalize over (C, T) per sample
        mean = jnp.mean(z, axis=(1, 2), keepdims=True)
        var = jnp.mean(jnp.square(z - mean), axis=(1, 2), keepdims=True)
        zn = (z - mean) / jnp.sqrt(var + eps)
        return zn * g[None, :, None] + be[None, :, None]

    def dwconv(z, w, b):  # depthwise Conv1d, groups == channels
        B_, H_, T_ = z.shape
        L = T_ + 2 * padding - dilation * (kernel - 1)
        zp = jnp.pad(z, ((0, 0), (0, 0), (padding, padding)))
        acc = jnp.zeros((B_, H_, L), z.dtype)
        for j in range(kernel):
            off = j * dilation
            acc = acc + w[None, :, 0, j, None] * zp[:, :, off:off + L]
        return acc + b[None, :, None]

    h = gln(prelu(conv1x1(x, w1, b1), a1), g1, be1)
    o = gln(prelu(dwconv(h, wd, bd), a2), g2, be2)
    return conv1x1(o, wr, br), conv1x1(o, ws, bs)


# --------------------------------- driver ------------------------------------

if __name__ == "__main__":
    B, CIN, HID, T = 2, 32, 64, 128
    KERNEL, DILATION, PADDING = 3, 1, 1
    EPS = 1e-8
    L_OUT = T + 2 * PADDING - DILATION * (KERNEL - 1)

    key = jax.random.PRNGKey(0)
    ks = jax.random.split(key, 13)
    x = jax.random.normal(ks[0], (B, CIN, T), jnp.float32)
    w1 = 0.1 * jax.random.normal(ks[1], (HID, CIN, 1), jnp.float32)
    b1 = 0.1 * jax.random.normal(ks[2], (HID,), jnp.float32)
    a1 = jnp.full((1,), 0.25, jnp.float32)
    g1 = 1.0 + 0.1 * jax.random.normal(ks[3], (HID,), jnp.float32)
    be1 = 0.1 * jax.random.normal(ks[4], (HID,), jnp.float32)
    wd = 0.1 * jax.random.normal(ks[5], (HID, 1, KERNEL), jnp.float32)
    bd = 0.1 * jax.random.normal(ks[6], (HID,), jnp.float32)
    a2 = jnp.full((1,), 0.25, jnp.float32)
    g2 = 1.0 + 0.1 * jax.random.normal(ks[7], (HID,), jnp.float32)
    be2 = 0.1 * jax.random.normal(ks[8], (HID,), jnp.float32)
    wr = 0.1 * jax.random.normal(ks[9], (CIN, HID, 1), jnp.float32)
    br = 0.1 * jax.random.normal(ks[10], (CIN,), jnp.float32)
    ws = 0.1 * jax.random.normal(ks[11], (CIN, HID, 1), jnp.float32)
    bs = 0.1 * jax.random.normal(ks[12], (CIN,), jnp.float32)

    res, skip = depth_conv1d_forward(
        x, w1, b1, a1, g1, be1, wd, bd, a2, g2, be2, wr, br, ws, bs,
        kernel=KERNEL, dilation=DILATION, padding=PADDING, eps=EPS)
    res, skip = jax.block_until_ready((res, skip))

    exp_res, exp_skip = _ref_depth_conv1d(
        x, w1, b1, a1, g1, be1, wd, bd, a2, g2, be2, wr, br, ws, bs,
        kernel=KERNEL, dilation=DILATION, padding=PADDING, eps=EPS)
    exp_res, exp_skip = jax.block_until_ready((exp_res, exp_skip))

    assert res.shape == exp_res.shape == (B, CIN, L_OUT), (res.shape,
                                                           exp_res.shape)
    assert skip.shape == exp_skip.shape == (B, CIN, L_OUT), (skip.shape,
                                                             exp_skip.shape)
    assert jnp.allclose(res, exp_res, atol=1e-3, rtol=1e-3), float(
        jnp.max(jnp.abs(res - exp_res)))
    assert jnp.allclose(skip, exp_skip, atol=1e-3, rtol=1e-3), float(
        jnp.max(jnp.abs(skip - exp_skip)))

    print("KERNEL_OK")
</pallas_src>

<mosaic_0001>
module attributes {stable_mosaic.version = 11 : i64} {
  func.func @_depthconv1d_kernel(%arg0: i32, %arg1: memref<1x32x128xf32, #tpu.memory_space<vmem>>, %arg2: memref<64x32xf32, #tpu.memory_space<vmem>>, %arg3: memref<64x1xf32, #tpu.memory_space<vmem>>, %arg4: memref<1x1xf32, #tpu.memory_space<vmem>>, %arg5: memref<64x1xf32, #tpu.memory_space<vmem>>, %arg6: memref<64x1xf32, #tpu.memory_space<vmem>>, %arg7: memref<64x3xf32, #tpu.memory_space<vmem>>, %arg8: memref<64x1xf32, #tpu.memory_space<vmem>>, %arg9: memref<1x1xf32, #tpu.memory_space<vmem>>, %arg10: memref<64x1xf32, #tpu.memory_space<vmem>>, %arg11: memref<64x1xf32, #tpu.memory_space<vmem>>, %arg12: memref<64x64xf32, #tpu.memory_space<vmem>>, %arg13: memref<64x1xf32, #tpu.memory_space<vmem>>, %arg14: memref<1x32x128xf32, #tpu.memory_space<vmem>>, %arg15: memref<1x32x128xf32, #tpu.memory_space<vmem>>, %arg16: memref<64x130xf32, #tpu.memory_space<vmem>>) attributes {dimension_semantics = [#tpu.dimension_semantics<parallel>], iteration_bounds = array<i64: 2>, scalar_prefetch = 0 : i64, scratch_operands = 1 : i64, tpu.core_type = #tpu.core_type<tc>, window_params = [{transform_indices = @transform_0, window_bounds = array<i64: 1, 32, 128>}, {pipeline_mode = #tpu.pipeline_mode<synchronous>, transform_indices = @transform_1, window_bounds = array<i64: 64, 32>}, {pipeline_mode = #tpu.pipeline_mode<synchronous>, transform_indices = @transform_2, window_bounds = array<i64: 64, 1>}, {pipeline_mode = #tpu.pipeline_mode<synchronous>, transform_indices = @transform_3, window_bounds = array<i64: 1, 1>}, {pipeline_mode = #tpu.pipeline_mode<synchronous>, transform_indices = @transform_4, window_bounds = array<i64: 64, 1>}, {pipeline_mode = #tpu.pipeline_mode<synchronous>, transform_indices = @transform_5, window_bounds = array<i64: 64, 1>}, {pipeline_mode = #tpu.pipeline_mode<synchronous>, transform_indices = @transform_6, window_bounds = array<i64: 64, 3>}, {pipeline_mode = #tpu.pipeline_mode<synchronous>, transform_indices = @transform_7, window_bounds = array<i64: 64, 1>}, {pipeline_mode = #tpu.pipeline_mode<synchronous>, transform_indices = @transform_8, window_bounds = array<i64: 1, 1>}, {pipeline_mode = #tpu.pipeline_mode<synchronous>, transform_indices = @transform_9, window_bounds = array<i64: 64, 1>}, {pipeline_mode = #tpu.pipeline_mode<synchronous>, transform_indices = @transform_10, window_bounds = array<i64: 64, 1>}, {pipeline_mode = #tpu.pipeline_mode<synchronous>, transform_indices = @transform_11, window_bounds = array<i64: 64, 64>}, {pipeline_mode = #tpu.pipeline_mode<synchronous>, transform_indices = @transform_12, window_bounds = array<i64: 64, 1>}, {transform_indices = @transform_13, window_bounds = array<i64: 1, 32, 128>}, {transform_indices = @transform_14, window_bounds = array<i64: 1, 32, 128>}]} {
    %c0 = arith.constant 0 : index
    %c0_0 = arith.constant 0 : index
    %c0_1 = arith.constant 0 : index
    %0 = vector.load %arg1[%c0, %c0_0, %c0_1] : memref<1x32x128xf32, #tpu.memory_space<vmem>>, vector<1x32x128xf32>
    %1 = vector.shape_cast %0 : vector<1x32x128xf32> to vector<32x128xf32>
    %c0_2 = arith.constant 0 : index
    %c0_3 = arith.constant 0 : index
    %2 = vector.load %arg2[%c0_2, %c0_3] : memref<64x32xf32, #tpu.memory_space<vmem>>, vector<64x32xf32>
    %cst = arith.constant dense<0.000000e+00> : vector<64x128xf32>
    %3 = tpu.matmul %2, %1, %cst {dimension_numbers = #tpu.dot_dimension_numbers<[1], [0], [0], [1], [0, 0, 1, 1], [], []>} : vector<64x32xf32>, vector<32x128xf32>, vector<64x128xf32> -> vector<64x128xf32>
    %c0_4 = arith.constant 0 : index
    %c0_5 = arith.constant 0 : index
    %4 = vector.load %arg3[%c0_4, %c0_5] : memref<64x1xf32, #tpu.memory_space<vmem>>, vector<64x1xf32>
    %5 = vector.broadcast %4 : vector<64x1xf32> to vector<64x128xf32>
    %6 = arith.addf %3, %5 : vector<64x128xf32>
    %cst_6 = arith.constant 0.000000e+00 : f32
    %7 = vector.broadcast %cst_6 : f32 to vector<64x128xf32>
    %8 = arith.cmpf oge, %6, %7 : vector<64x128xf32>
    %c0_7 = arith.constant 0 : index
    %c0_8 = arith.constant 0 : index
    %9 = vector.load %arg4[%c0_7, %c0_8] : memref<1x1xf32, #tpu.memory_space<vmem>>, vector<1x1xf32>
    %10 = vector.broadcast %9 : vector<1x1xf32> to vector<64x128xf32>
    %11 = arith.mulf %10, %6 : vector<64x128xf32>
    %12 = arith.select %8, %6, %11 : vector<64x128xi1>, vector<64x128xf32>
    %13 = vector.shape_cast %12 : vector<64x128xf32> to vector<1x64x128xf32>
    %cst_9 = arith.constant dense<0.000000e+00> : vector<1xf32>
    %14 = vector.multi_reduction <add>, %13, %cst_9 [1, 2] : vector<1x64x128xf32> to vector<1xf32>
    %15 = vector.shape_cast %14 : vector<1xf32> to vector<1x1x1xf32>
    %16 = vector.extract %15[0, 0, 0] : f32 from vector<1x1x1xf32>
    %17 = arith.mulf %12, %12 : vector<64x128xf32>
    %18 = vector.shape_cast %17 : vector<64x128xf32> to vector<1x64x128xf32>
    %cst_10 = arith.constant dense<0.000000e+00> : vector<1xf32>
    %19 = vector.multi_reduction <add>, %18, %cst_10 [1, 2] : vector<1x64x128xf32> to vector<1xf32>
    %20 = vector.shape_cast %19 : vector<1xf32> to vector<1x1x1xf32>
    %21 = vector.extract %20[0, 0, 0] : f32 from vector<1x1x1xf32>
    %cst_11 = arith.constant 1.22070313E-4 : f32
    %22 = arith.mulf %16, %cst_11 : f32
    %cst_12 = arith.constant 1.22070313E-4 : f32
    %23 = arith.mulf %21, %cst_12 : f32
    %24 = arith.mulf %22, %22 : f32
    %25 = arith.subf %23, %24 : f32
    %c0_13 = arith.constant 0 : index
    %c0_14 = arith.constant 0 : index
    %26 = vector.load %arg5[%c0_13, %c0_14] : memref<64x1xf32, #tpu.memory_space<vmem>>, vector<64x1xf32>
    %cst_15 = arith.constant 9.99999993E-9 : f32
    %27 = arith.addf %25, %cst_15 : f32
    %28 = math.rsqrt %27 : f32
    %29 = vector.broadcast %28 : f32 to vector<64x1xf32>
    %30 = arith.mulf %26, %29 : vector<64x1xf32>
    %c0_16 = arith.constant 0 : index
    %c0_17 = arith.constant 0 : index
    %31 = vector.load %arg6[%c0_16, %c0_17] : memref<64x1xf32, #tpu.memory_space<vmem>>, vector<64x1xf32>
    %32 = vector.broadcast %22 : f32 to vector<64x1xf32>
    %33 = arith.mulf %32, %30 : vector<64x1xf32>
    %34 = arith.subf %31, %33 : vector<64x1xf32>
    %35 = vector.broadcast %30 : vector<64x1xf32> to vector<64x128xf32>
    %36 = arith.mulf %12, %35 : vector<64x128xf32>
    %37 = vector.broadcast %34 : vector<64x1xf32> to vector<64x128xf32>
    %38 = arith.addf %36, %37 : vector<64x128xf32>
    %cst_18 = arith.constant 0.000000e+00 : f32
    %39 = vector.broadcast %cst_18 : f32 to vector<64x1xf32>
    %c0_19 = arith.constant 0 : index
    %c0_20 = arith.constant 0 : index
    %40 = vector.load %arg16[%c0_19, %c0_20] : memref<64x130xf32, #tpu.memory_space<vmem>>, vector<64x1xf32>
    tpu.vector_store %arg16[%c0_19, %c0_20], %39 {strides = array<i32>} : memref<64x130xf32, #tpu.memory_space<vmem>>, vector<64x1xf32>,
    %cst_21 = arith.constant 0.000000e+00 : f32
    %41 = vector.broadcast %cst_21 : f32 to vector<64x1xf32>
    %c0_22 = arith.constant 0 : index
    %c129 = arith.constant 129 : index
    %42 = vector.load %arg16[%c0_22, %c129] : memref<64x130xf32, #tpu.memory_space<vmem>>, vector<64x1xf32>
    tpu.vector_store %arg16[%c0_22, %c129], %41 {strides = array<i32>} : memref<64x130xf32, #tpu.memory_space<vmem>>, vector<64x1xf32>,
    %c0_23 = arith.constant 0 : index
    %c1 = arith.constant 1 : index
    %43 = vector.load %arg16[%c0_23, %c1] : memref<64x130xf32, #tpu.memory_space<vmem>>, vector<64x128xf32>
    tpu.vector_store %arg16[%c0_23, %c1], %38 {strides = array<i32>} : memref<64x130xf32, #tpu.memory_space<vmem>>, vector<64x128xf32>,
    %c0_24 = arith.constant 0 : index
    %c0_25 = arith.constant 0 : index
    %44 = vector.load %arg7[%c0_24, %c0_25] : memref<64x3xf32, #tpu.memory_space<vmem>>, vector<64x3xf32>
    %45 = vector.extract_strided_slice %44 {offsets = [0, 0], sizes = [64, 1], strides = [1, 1]} : vector<64x3xf32> to vector<64x1xf32>
    %c0_26 = arith.constant 0 : index
    %c0_27 = arith.constant 0 : index
    %46 = vector.load %arg16[%c0_26, %c0_27] : memref<64x130xf32, #tpu.memory_space<vmem>>, vector<64x128xf32>
    %47 = vector.broadcast %45 : vector<64x1xf32> to vector<64x128xf32>
    %48 = arith.mulf %47, %46 : vector<64x128xf32>
    %49 = vector.extract_strided_slice %44 {offsets = [0, 1], sizes = [64, 1], strides = [1, 1]} : vector<64x3xf32> to vector<64x1xf32>
    %c0_28 = arith.constant 0 : index
    %c1_29 = arith.constant 1 : index
    %50 = vector.load %arg16[%c0_28, %c1_29] : memref<64x130xf32, #tpu.memory_space<vmem>>, vector<64x128xf32>
    %51 = vector.broadcast %49 : vector<64x1xf32> to vector<64x128xf32>
    %52 = arith.mulf %51, %50 : vector<64x128xf32>
    %53 = arith.addf %48, %52 : vector<64x128xf32>
    %54 = vector.extract_strided_slice %44 {offsets = [0, 2], sizes = [64, 1], strides = [1, 1]} : vector<64x3xf32> to vector<64x1xf32>
    %c0_30 = arith.constant 0 : index
    %c2 = arith.constant 2 : index
    %55 = vector.load %arg16[%c0_30, %c2] : memref<64x130xf32, #tpu.memory_space<vmem>>, vector<64x128xf32>
    %56 = vector.broadcast %54 : vector<64x1xf32> to vector<64x128xf32>
    %57 = arith.mulf %56, %55 : vector<64x128xf32>
    %58 = arith.addf %53, %57 : vector<64x128xf32>
    %c0_31 = arith.constant 0 : index
    %c0_32 = arith.constant 0 : index
    %59 = vector.load %arg8[%c0_31, %c0_32] : memref<64x1xf32, #tpu.memory_space<vmem>>, vector<64x1xf32>
    %60 = vector.broadcast %59 : vector<64x1xf32> to vector<64x128xf32>
    %61 = arith.addf %58, %60 : vector<64x128xf32>
    %cst_33 = arith.constant 0.000000e+00 : f32
    %62 = vector.broadcast %cst_33 : f32 to vector<64x128xf32>
    %63 = arith.cmpf oge, %61, %62 : vector<64x128xf32>
    %c0_34 = arith.constant 0 : index
    %c0_35 = arith.constant 0 : index
    %64 = vector.load %arg9[%c0_34, %c0_35] : memref<1x1xf32, #tpu.memory_space<vmem>>, vector<1x1xf32>
    %65 = vector.broadcast %64 : vector<1x1xf32> to vector<64x128xf32>
    %66 = arith.mulf %65, %61 : vector<64x128xf32>
    %67 = arith.select %63, %61, %66 : vector<64x128xi1>, vector<64x128xf32>
    %68 = vector.shape_cast %67 : vector<64x128xf32> to vector<1x64x128xf32>
    %cst_36 = arith.constant dense<0.000000e+00> : vector<1xf32>
    %69 = vector.multi_reduction <add>, %68, %cst_36 [1, 2] : vector<1x64x128xf32> to vector<1xf32>
    %70 = vector.shape_cast %69 : vector<1xf32> to vector<1x1x1xf32>
    %71 = vector.extract %70[0, 0, 0] : f32 from vector<1x1x1xf32>
    %72 = arith.mulf %67, %67 : vector<64x128xf32>
    %73 = vector.shape_cast %72 : vector<64x128xf32> to vector<1x64x128xf32>
    %cst_37 = arith.constant dense<0.000000e+00> : vector<1xf32>
    %74 = vector.multi_reduction <add>, %73, %cst_37 [1, 2] : vector<1x64x128xf32> to vector<1xf32>
    %75 = vector.shape_cast %74 : vector<1xf32> to vector<1x1x1xf32>
    %76 = vector.extract %75[0, 0, 0] : f32 from vector<1x1x1xf32>
    %cst_38 = arith.constant 1.22070313E-4 : f32
    %77 = arith.mulf %71, %cst_38 : f32
    %cst_39 = arith.constant 1.22070313E-4 : f32
    %78 = arith.mulf %76, %cst_39 : f32
    %79 = arith.mulf %77, %77 : f32
    %80 = arith.subf %78, %79 : f32
    %c0_40 = arith.constant 0 : index
    %c0_41 = arith.constant 0 : index
    %81 = vector.load %arg10[%c0_40, %c0_41] : memref<64x1xf32, #tpu.memory_space<vmem>>, vector<64x1xf32>
    %cst_42 = arith.constant 9.99999993E-9 : f32
    %82 = arith.addf %80, %cst_42 : f32
    %83 = math.rsqrt %82 : f32
    %84 = vector.broadcast %83 : f32 to vector<64x1xf32>
    %85 = arith.mulf %81, %84 : vector<64x1xf32>
    %c0_43 = arith.constant 0 : index
    %c0_44 = arith.constant 0 : index
    %86 = vector.load %arg11[%c0_43, %c0_44] : memref<64x1xf32, #tpu.memory_space<vmem>>, vector<64x1xf32>
    %87 = vector.broadcast %77 : f32 to vector<64x1xf32>
    %88 = arith.mulf %87, %85 : vector<64x1xf32>
    %89 = arith.subf %86, %88 : vector<64x1xf32>
    %90 = vector.broadcast %85 : vector<64x1xf32> to vector<64x128xf32>
    %91 = arith.mulf %67, %90 : vector<64x128xf32>
    %92 = vector.broadcast %89 : vector<64x1xf32> to vector<64x128xf32>
    %93 = arith.addf %91, %92 : vector<64x128xf32>
    %c0_45 = arith.constant 0 : index
    %c0_46 = arith.constant 0 : index
    %94 = vector.load %arg12[%c0_45, %c0_46] : memref<64x64xf32, #tpu.memory_space<vmem>>, vector<64x64xf32>
    %cst_47 = arith.constant dense<0.000000e+00> : vector<64x128xf32>
    %95 = tpu.matmul %94, %93, %cst_47 {dimension_numbers = #tpu.dot_dimension_numbers<[1], [0], [0], [1], [0, 0, 1, 1], [], []>} : vector<64x64xf32>, vector<64x128xf32>, vector<64x128xf32> -> vector<64x128xf32>
    %c0_48 = arith.constant 0 : index
    %c0_49 = arith.constant 0 : index
    %96 = vector.load %arg13[%c0_48, %c0_49] : memref<64x1xf32, #tpu.memory_space<vmem>>, vector<64x1xf32>
    %97 = vector.broadcast %96 : vector<64x1xf32> to vector<64x128xf32>
    %98 = arith.addf %95, %97 : vector<64x128xf32>
    %99 = vector.extract_strided_slice %98 {offsets = [0, 0], sizes = [32, 128], strides = [1, 1]} : vector<64x128xf32> to vector<32x128xf32>
    %c0_50 = arith.constant 0 : index
    %c0_51 = arith.constant 0 : index
    %c0_52 = arith.constant 0 : index
    %100 = vector.load %arg14[%c0_50, %c0_51, %c0_52] : memref<1x32x128xf32, #tpu.memory_space<vmem>>, vector<1x32x128xf32>
    %101 = vector.shape_cast %100 : vector<1x32x128xf32> to vector<32x128xf32>
    %102 = vector.shape_cast %99 : vector<32x128xf32> to vector<1x32x128xf32>
    tpu.vector_store %arg14[%c0_50, %c0_51, %c0_52], %102 {strides = array<i32>} : memref<1x32x128xf32, #tpu.memory_space<vmem>>, vector<1x32x128xf32>,
    %103 = vector.extract_strided_slice %98 {offsets = [32, 0], sizes = [32, 128], strides = [1, 1]} : vector<64x128xf32> to vector<32x128xf32>
    %c0_53 = arith.constant 0 : index
    %c0_54 = arith.constant 0 : index
    %c0_55 = arith.constant 0 : index
    %104 = vector.load %arg15[%c0_53, %c0_54, %c0_55] : memref<1x32x128xf32, #tpu.memory_space<vmem>>, vector<1x32x128xf32>
    %105 = vector.shape_cast %104 : vector<1x32x128xf32> to vector<32x128xf32>
    %106 = vector.shape_cast %103 : vector<32x128xf32> to vector<1x32x128xf32>
    tpu.vector_store %arg15[%c0_53, %c0_54, %c0_55], %106 {strides = array<i32>} : memref<1x32x128xf32, #tpu.memory_space<vmem>>, vector<1x32x128xf32>,
    return
  }
  func.func @transform_0(%arg0: i32) -> (i32, i32, i32) {
    %c0_i32 = arith.constant 0 : i32
    %c0_i32_0 = arith.constant 0 : i32
    %c0_i32_1 = arith.constant 0 : i32
    return %arg0, %c0_i32, %c0_i32_0 : i32, i32, i32
  }
  func.func @transform_1(%arg0: i32) -> (i32, i32) {
    %c0_i32 = arith.constant 0 : i32
    %c0_i32_0 = arith.constant 0 : i32
    %c0_i32_1 = arith.constant 0 : i32
    return %c0_i32, %c0_i32_0 : i32, i32
  }
  func.func @transform_2(%arg0: i32) -> (i32, i32) {
    %c0_i32 = arith.constant 0 : i32
    %c0_i32_0 = arith.constant 0 : i32
    %c0_i32_1 = arith.constant 0 : i32
    return %c0_i32, %c0_i32_0 : i32, i32
  }
  func.func @transform_3(%arg0: i32) -> (i32, i32) {
    %c0_i32 = arith.constant 0 : i32
    %c0_i32_0 = arith.constant 0 : i32
    %c0_i32_1 = arith.constant 0 : i32
    return %c0_i32, %c0_i32_0 : i32, i32
  }
  func.func @transform_4(%arg0: i32) -> (i32, i32) {
    %c0_i32 = arith.constant 0 : i32
    %c0_i32_0 = arith.constant 0 : i32
    %c0_i32_1 = arith.constant 0 : i32
    return %c0_i32, %c0_i32_0 : i32, i32
  }
  func.func @transform_5(%arg0: i32) -> (i32, i32) {
    %c0_i32 = arith.constant 0 : i32
    %c0_i32_0 = arith.constant 0 : i32
    %c0_i32_1 = arith.constant 0 : i32
    return %c0_i32, %c0_i32_0 : i32, i32
  }
  func.func @transform_6(%arg0: i32) -> (i32, i32) {
    %c0_i32 = arith.constant 0 : i32
    %c0_i32_0 = arith.constant 0 : i32
    %c0_i32_1 = arith.constant 0 : i32
    return %c0_i32, %c0_i32_0 : i32, i32
  }
  func.func @transform_7(%arg0: i32) -> (i32, i32) {
    %c0_i32 = arith.constant 0 : i32
    %c0_i32_0 = arith.constant 0 : i32
    %c0_i32_1 = arith.constant 0 : i32
    return %c0_i32, %c0_i32_0 : i32, i32
  }
  func.func @transform_8(%arg0: i32) -> (i32, i32) {
    %c0_i32 = arith.constant 0 : i32
    %c0_i32_0 = arith.constant 0 : i32
    %c0_i32_1 = arith.constant 0 : i32
    return %c0_i32, %c0_i32_0 : i32, i32
  }
  func.func @transform_9(%arg0: i32) -> (i32, i32) {
    %c0_i32 = arith.constant 0 : i32
    %c0_i32_0 = arith.constant 0 : i32
    %c0_i32_1 = arith.constant 0 : i32
    return %c0_i32, %c0_i32_0 : i32, i32
  }
  func.func @transform_10(%arg0: i32) -> (i32, i32) {
    %c0_i32 = arith.constant 0 : i32
    %c0_i32_0 = arith.constant 0 : i32
    %c0_i32_1 = arith.constant 0 : i32
    return %c0_i32, %c0_i32_0 : i32, i32
  }
  func.func @transform_11(%arg0: i32) -> (i32, i32) {
    %c0_i32 = arith.constant 0 : i32
    %c0_i32_0 = arith.constant 0 : i32
    %c0_i32_1 = arith.constant 0 : i32
    return %c0_i32, %c0_i32_0 : i32, i32
  }
  func.func @transform_12(%arg0: i32) -> (i32, i32) {
    %c0_i32 = arith.constant 0 : i32
    %c0_i32_0 = arith.constant 0 : i32
    %c0_i32_1 = arith.constant 0 : i32
    return %c0_i32, %c0_i32_0 : i32, i32
  }
  func.func @transform_13(%arg0: i32) -> (i32, i32, i32) {
    %c0_i32 = arith.constant 0 : i32
    %c0_i32_0 = arith.constant 0 : i32
    %c0_i32_1 = arith.constant 0 : i32
    return %arg0, %c0_i32, %c0_i32_0 : i32, i32, i32
  }
  func.func @transform_14(%arg0: i32) -> (i32, i32, i32) {
    %c0_i32 = arith.constant 0 : i32
    %c0_i32_0 = arith.constant 0 : i32
    %c0_i32_1 = arith.constant 0 : i32
    return %arg0, %c0_i32, %c0_i32_0 : i32, i32, i32
  }
}

</mosaic_0001>

<llo_original>
// kernel: depth_conv1d_forward.1
$region0: #{depth_conv1d_forward.1}
  #allocation0 [shape = 'u32[]', space=smem, size = 0x4, offset = 0x4, fixed_abs, tag = 'smem constant byte address 0x4 - core index']
  #allocation1 [shape = 'u32[144,128]{1,0:T(1,128)}', space=vmem, size = 0x12000, scoped, tag = 'internal scratch']
  #allocation2 [shape = 'f32[64,130]{1,0:T(8,128)}', space=vmem, size = 0x10000, scoped, tag = 'scratch operand']
  #allocation3 [shape = 'f32[1,1]{1,0:T(1,128)S(1)}', space=vmem, size = 0x200, scoped, tag = 'scoped memory for depth_conv1d_forward.1']
  #allocation4 [shape = 'f32[1,1]{1,0:T(1,128)S(1)}', space=vmem, size = 0x200, scoped, tag = 'scoped memory for depth_conv1d_forward.1']
  %s0 = inlined_call_operand.vmem [shape: f32[2,32,128], index: 0, kind: input, shape index: {}]
  %s1 = inlined_call_operand.vmem [shape: f32[64,32], index: 1, kind: input, shape index: {}]
  %s2 = inlined_call_operand.vmem [shape: f32[64,1], index: 2, kind: input, shape index: {}]
  %s3 = inlined_call_operand.<no memory space> [shape: f32[1,1], index: 3, kind: input, shape index: {}]
  %s4 = inlined_call_operand.vmem [shape: f32[64,1], index: 4, kind: input, shape index: {}]
  %s5 = inlined_call_operand.vmem [shape: f32[64,1], index: 5, kind: input, shape index: {}]
  %s6 = inlined_call_operand.vmem [shape: f32[64,3], index: 6, kind: input, shape index: {}]
  %s7 = inlined_call_operand.vmem [shape: f32[64,1], index: 7, kind: input, shape index: {}]
  %s8 = inlined_call_operand.<no memory space> [shape: f32[1,1], index: 8, kind: input, shape index: {}]
  %s9 = inlined_call_operand.vmem [shape: f32[64,1], index: 9, kind: input, shape index: {}]
  %s10 = inlined_call_operand.vmem [shape: f32[64,1], index: 10, kind: input, shape index: {}]
  %s11 = inlined_call_operand.vmem [shape: f32[64,64], index: 11, kind: input, shape index: {}]
  %s12 = inlined_call_operand.vmem [shape: f32[64,1], index: 12, kind: input, shape index: {}]
  %s13 = inlined_call_operand.hbm [shape: f32[2,32,128], index: 13, kind: output, shape index: {0}]
  %s14 = inlined_call_operand.hbm [shape: f32[2,32,128], index: 14, kind: output, shape index: {1}]
  %15 = xla_tuple %s13, %s14
  %s16 = sld [smem:[#allocation0]]
  $region93: #{depth_conv1d_forward.1} parent=0
    _
  %s18 = ssub.s32 1, %s16
  %s19 = scalar_select 0, %s18, %s16
  %v20 = vstv %s3
  %21 = vst [vmem:[#allocation3] sm:$0x1] %v20
  %v22 = vstv %s8
  %23 = vst [vmem:[#allocation4] sm:$0x1] %v22
  $region1: #{depth_conv1d_forward.1} parent=0
    #allocation5 [shape = 'u8[32768]{0}', space=vmem, size = 0x8000, scoped, tag = 'output window, operand 0']
    #allocation6 [shape = 's32[2]{0}', space=sflag, size = 0x8, scoped, tag = 'scoped memory for depth_conv1d_forward.1']
    #allocation7 [shape = 'u8[32768]{0}', space=vmem, size = 0x8000, scoped, tag = 'output window, operand 1']
    #allocation8 [shape = 's32[2]{0}', space=sflag, size = 0x8, scoped, tag = 'scoped memory for depth_conv1d_forward.1']
    %24 = vsyncpa [#allocation6], 0
    %s25 = scalar_lea.sflag [#allocation6], 1
    %26 = vsyncpa %s25, 0
    %27 = vsyncpa [#allocation8], 0
    %s28 = scalar_lea.sflag [#allocation8], 1
    %29 = vsyncpa %s28, 0
    loop: start=0, step=1, limit=4
    $region2: #{depth_conv1d_forward.1} parent=1 // loop_pre_header
      _
    $region3: #{depth_conv1d_forward.1} parent=1 // loop_header
      %s31 = sphi 0, %s35
      %p32 = scmp.ge.s32.totalorder %s31, 4
      %s41 = sphi 0, %s43
      %s44 = sphi 0, %s41
      %s45 = sphi 0, %s44
      %s61 = sphi 0, %s45
      %s65 = sphi 0, %s65
      %s67 = sphi 0, %s65
      %s68 = sphi 0, %s67
      %s82 = sphi 0, %s68
      %s86 = sphi 0, %s86
      %s88 = sphi 0, %s86
      %s89 = sphi 0, %s88
      %s103 = sphi 0, %s89
      %s107 = sphi 0, %s107
      %s109 = sphi 0, %s107
      %s110 = sphi 0, %s109
      %s124 = sphi 0, %s110
      %s128 = sphi 0, %s128
      %s130 = sphi 0, %s128
      %s131 = sphi 0, %s130
      %s145 = sphi 0, %s131
      %s149 = sphi 0, %s149
      %s151 = sphi 0, %s149
      %s152 = sphi 0, %s151
      %s166 = sphi 0, %s152
      %s170 = sphi 0, %s170
      %s172 = sphi 0, %s170
      %s173 = sphi 0, %s172
      %s187 = sphi 0, %s173
      %s191 = sphi 0, %s191
      %s193 = sphi 0, %s191
      %s194 = sphi 0, %s193
      %s208 = sphi 0, %s194
      %s212 = sphi 0, %s212
      %s214 = sphi 0, %s212
      %s215 = sphi 0, %s214
      %s229 = sphi 0, %s215
      %s233 = sphi 0, %s233
      %s235 = sphi 0, %s233
      %s236 = sphi 0, %s235
      %s250 = sphi 0, %s236
      %s254 = sphi 0, %s254
      %s256 = sphi 0, %s254
      %s257 = sphi 0, %s256
      %s271 = sphi 0, %s257
      %s275 = sphi 0, %s275
      %s277 = sphi 0, %s275
      %s278 = sphi 0, %s277
      %s292 = sphi 0, %s278
      %s296 = sphi 0, %s296
      %s298 = sphi 0, %s296
      %s299 = sphi 0, %s298
      %s313 = sphi 0, %s299
      %s319 = sphi 0, %s321
      %s322 = sphi 0, %s319
      %s323 = sphi 0, %s322
      %s339 = sphi 0, %s323
      %s345 = sphi 0, %s347
      %s348 = sphi 0, %s345
      %s349 = sphi 0, %s348
      %s365 = sphi 0, %s349
    $region4: #{depth_conv1d_forward.1} parent=1 // loop_header_branch
      %34 = sbr.rel (%p32) target = $region8
    $region5: #{depth_conv1d_forward.1} parent=1 // loop_body
      %s36 = ssub.s32 %s31, 1
      %s37 = ssub.s32 %s31, 2
      %s38 = sadd.s32 %s31, 1
      %s39 = ssub.s32 %s31, %s38
      %p40 = scmp.eq.s32.totalorder %s39, 0
      %s42 = sadd.s32 %s41, 1
      %s43 = scalar_select %p40, %s41, %s42
      %p46 = pneg %p40
      %p47 = scmp.eq.s32.totalorder %s31, 1
      %p48 = por %p46, %p47
      %p49 = scmp.ne.s32.totalorder %s41, %s44
      %p50 = scmp.eq.s32.totalorder %s31, 0
      %p51 = por %p49, %p50
      %p52 = scmp.ne.s32.totalorder %s41, %s44
      %p53 = scmp.eq.s32.totalorder %s36, 1
      %p54 = por %p52, %p53
      %p55 = scmp.ne.s32.totalorder %s44, %s45
      %p56 = scmp.eq.s32.totalorder %s36, 0
      %p57 = por %p55, %p56
      %p58 = scmp.ne.s32.totalorder %s44, %s45
      %p59 = scmp.eq.s32.totalorder %s37, 1
      %p60 = por %p58, %p59
      %p62 = scmp.ne.s32.totalorder %s45, %s61
      %p63 = scmp.eq.s32.totalorder %s37, 0
      %p64 = por %p62, %p63
      %s66 = sadd.s32 %s65, 1
      %p69 = scmp.eq.s32.totalorder %s31, 1
      %p70 = scmp.ne.s32.totalorder %s65, %s67
      %p71 = scmp.eq.s32.totalorder %s31, 0
      %p72 = por %p70, %p71
      %p73 = scmp.ne.s32.totalorder %s65, %s67
      %p74 = scmp.eq.s32.totalorder %s36, 1
      %p75 = por %p73, %p74
      %p76 = scmp.ne.s32.totalorder %s67, %s68
      %p77 = scmp.eq.s32.totalorder %s36, 0
      %p78 = por %p76, %p77
      %p79 = scmp.ne.s32.totalorder %s67, %s68
      %p80 = scmp.eq.s32.totalorder %s37, 1
      %p81 = por %p79, %p80
      %p83 = scmp.ne.s32.totalorder %s68, %s82
      %p84 = scmp.eq.s32.totalorder %s37, 0
      %p85 = por %p83, %p84
      %s87 = sadd.s32 %s86, 1
      %p90 = scmp.eq.s32.totalorder %s31, 1
      %p91 = scmp.ne.s32.totalorder %s86, %s88
      %p92 = scmp.eq.s32.totalorder %s31, 0
      %p93 = por %p91, %p92
      %p94 = scmp.ne.s32.totalorder %s86, %s88
      %p95 = scmp.eq.s32.totalorder %s36, 1
      %p96 = por %p94, %p95
      %p97 = scmp.ne.s32.totalorder %s88, %s89
      %p98 = scmp.eq.s32.totalorder %s36, 0
      %p99 = por %p97, %p98
      %p100 = scmp.ne.s32.totalorder %s88, %s89
      %p101 = scmp.eq.s32.totalorder %s37, 1
      %p102 = por %p100, %p101
      %p104 = scmp.ne.s32.totalorder %s89, %s103
      %p105 = scmp.eq.s32.totalorder %s37, 0
      %p106 = por %p104, %p105
      %s108 = sadd.s32 %s107, 1
      %p111 = scmp.eq.s32.totalorder %s31, 1
      %p112 = scmp.ne.s32.totalorder %s107, %s109
      %p113 = scmp.eq.s32.totalorder %s31, 0
      %p114 = por %p112, %p113
      %p115 = scmp.ne.s32.totalorder %s107, %s109
      %p116 = scmp.eq.s32.totalorder %s36, 1
      %p117 = por %p115, %p116
      %p118 = scmp.ne.s32.totalorder %s109, %s110
      %p119 = scmp.eq.s32.totalorder %s36, 0
      %p120 = por %p118, %p119
      %p121 = scmp.ne.s32.totalorder %s109, %s110
      %p122 = scmp.eq.s32.totalorder %s37, 1
      %p123 = por %p121, %p122
      %p125 = scmp.ne.s32.totalorder %s110, %s124
      %p126 = scmp.eq.s32.totalorder %s37, 0
      %p127 = por %p125, %p126
      %s129 = sadd.s32 %s128, 1
      %p132 = scmp.eq.s32.totalorder %s31, 1
      %p133 = scmp.ne.s32.totalorder %s128, %s130
      %p134 = scmp.eq.s32.totalorder %s31, 0
      %p135 = por %p133, %p134
      %p136 = scmp.ne.s32.totalorder %s128, %s130
      %p137 = scmp.eq.s32.totalorder %s36, 1
      %p138 = por %p136, %p137
      %p139 = scmp.ne.s32.totalorder %s130, %s131
      %p140 = scmp.eq.s32.totalorder %s36, 0
      %p141 = por %p139, %p140
      %p142 = scmp.ne.s32.totalorder %s130, %s131
      %p143 = scmp.eq.s32.totalorder %s37, 1
      %p144 = por %p142, %p143
      %p146 = scmp.ne.s32.totalorder %s131, %s145
      %p147 = scmp.eq.s32.totalorder %s37, 0
      %p148 = por %p146, %p147
      %s150 = sadd.s32 %s149, 1
      %p153 = scmp.eq.s32.totalorder %s31, 1
      %p154 = scmp.ne.s32.totalorder %s149, %s151
      %p155 = scmp.eq.s32.totalorder %s31, 0
      %p156 = por %p154, %p155
      %p157 = scmp.ne.s32.totalorder %s149, %s151
      %p158 = scmp.eq.s32.totalorder %s36, 1
      %p159 = por %p157, %p158
      %p160 = scmp.ne.s32.totalorder %s151, %s152
      %p161 = scmp.eq.s32.totalorder %s36, 0
      %p162 = por %p160, %p161
      %p163 = scmp.ne.s32.totalorder %s151, %s152
      %p164 = scmp.eq.s32.totalorder %s37, 1
      %p165 = por %p163, %p164
      %p167 = scmp.ne.s32.totalorder %s152, %s166
      %p168 = scmp.eq.s32.totalorder %s37, 0
      %p169 = por %p167, %p168
      %s171 = sadd.s32 %s170, 1
      %p174 = scmp.eq.s32.totalorder %s31, 1
      %p175 = scmp.ne.s32.totalorder %s170, %s172
      %p176 = scmp.eq.s32.totalorder %s31, 0
      %p177 = por %p175, %p176
      %p178 = scmp.ne.s32.totalorder %s170, %s172
      %p179 = scmp.eq.s32.totalorder %s36, 1
      %p180 = por %p178, %p179
      %p181 = scmp.ne.s32.totalorder %s172, %s173
      %p182 = scmp.eq.s32.totalorder %s36, 0
      %p183 = por %p181, %p182
      %p184 = scmp.ne.s32.totalorder %s172, %s173
      %p185 = scmp.eq.s32.totalorder %s37, 1
      %p186 = por %p184, %p185
      %p188 = scmp.ne.s32.totalorder %s173, %s187
      %p189 = scmp.eq.s32.totalorder %s37, 0
      %p190 = por %p188, %p189
      %s192 = sadd.s32 %s191, 1
      %p195 = scmp.eq.s32.totalorder %s31, 1
      %p196 = scmp.ne.s32.totalorder %s191, %s193
      %p197 = scmp.eq.s32.totalorder %s31, 0
      %p198 = por %p196, %p197
      %p199 = scmp.ne.s32.totalorder %s191, %s193
      %p200 = scmp.eq.s32.totalorder %s36, 1
      %p201 = por %p199, %p200
      %p202 = scmp.ne.s32.totalorder %s193, %s194
      %p203 = scmp.eq.s32.totalorder %s36, 0
      %p204 = por %p202, %p203
      %p205 = scmp.ne.s32.totalorder %s193, %s194
      %p206 = scmp.eq.s32.totalorder %s37, 1
      %p207 = por %p205, %p206
      %p209 = scmp.ne.s32.totalorder %s194, %s208
      %p210 = scmp.eq.s32.totalorder %s37, 0
      %p211 = por %p209, %p210
      %s213 = sadd.s32 %s212, 1
      %p216 = scmp.eq.s32.totalorder %s31, 1
      %p217 = scmp.ne.s32.totalorder %s212, %s214
      %p218 = scmp.eq.s32.totalorder %s31, 0
      %p219 = por %p217, %p218
      %p220 = scmp.ne.s32.totalorder %s212, %s214
      %p221 = scmp.eq.s32.totalorder %s36, 1
      %p222 = por %p220, %p221
      %p223 = scmp.ne.s32.totalorder %s214, %s215
      %p224 = scmp.eq.s32.totalorder %s36, 0
      %p225 = por %p223, %p224
      %p226 = scmp.ne.s32.totalorder %s214, %s215
      %p227 = scmp.eq.s32.totalorder %s37, 1
      %p228 = por %p226, %p227
      %p230 = scmp.ne.s32.totalorder %s215, %s229
      %p231 = scmp.eq.s32.totalorder %s37, 0
      %p232 = por %p230, %p231
      %s234 = sadd.s32 %s233, 1
      %p237 = scmp.eq.s32.totalorder %s31, 1
      %p238 = scmp.ne.s32.totalorder %s233, %s235
      %p239 = scmp.eq.s32.totalorder %s31, 0
      %p240 = por %p238, %p239
      %p241 = scmp.ne.s32.totalorder %s233, %s235
      %p242 = scmp.eq.s32.totalorder %s36, 1
      %p243 = por %p241, %p242
      %p244 = scmp.ne.s32.totalorder %s235, %s236
      %p245 = scmp.eq.s32.totalorder %s36, 0
      %p246 = por %p244, %p245
      %p247 = scmp.ne.s32.totalorder %s235, %s236
      %p248 = scmp.eq.s32.totalorder %s37, 1
      %p249 = por %p247, %p248
      %p251 = scmp.ne.s32.totalorder %s236, %s250
      %p252 = scmp.eq.s32.totalorder %s37, 0
      %p253 = por %p251, %p252
      %s255 = sadd.s32 %s254, 1
      %p258 = scmp.eq.s32.totalorder %s31, 1
      %p259 = scmp.ne.s32.totalorder %s254, %s256
      %p260 = scmp.eq.s32.totalorder %s31, 0
      %p261 = por %p259, %p260
      %p262 = scmp.ne.s32.totalorder %s254, %s256
      %p263 = scmp.eq.s32.totalorder %s36, 1
      %p264 = por %p262, %p263
      %p265 = scmp.ne.s32.totalorder %s256, %s257
      %p266 = scmp.eq.s32.totalorder %s36, 0
      %p267 = por %p265, %p266
      %p268 = scmp.ne.s32.totalorder %s256, %s257
      %p269 = scmp.eq.s32.totalorder %s37, 1
      %p270 = por %p268, %p269
      %p272 = scmp.ne.s32.totalorder %s257, %s271
      %p273 = scmp.eq.s32.totalorder %s37, 0
      %p274 = por %p272, %p273
      %s276 = sadd.s32 %s275, 1
      %p279 = scmp.eq.s32.totalorder %s31, 1
      %p280 = scmp.ne.s32.totalorder %s275, %s277
      %p281 = scmp.eq.s32.totalorder %s31, 0
      %p282 = por %p280, %p281
      %p283 = scmp.ne.s32.totalorder %s275, %s277
      %p284 = scmp.eq.s32.totalorder %s36, 1
      %p285 = por %p283, %p284
      %p286 = scmp.ne.s32.totalorder %s277, %s278
      %p287 = scmp.eq.s32.totalorder %s36, 0
      %p288 = por %p286, %p287
      %p289 = scmp.ne.s32.totalorder %s277, %s278
      %p290 = scmp.eq.s32.totalorder %s37, 1
      %p291 = por %p289, %p290
      %p293 = scmp.ne.s32.totalorder %s278, %s292
      %p294 = scmp.eq.s32.totalorder %s37, 0
      %p295 = por %p293, %p294
      %s297 = sadd.s32 %s296, 1
      %p300 = scmp.eq.s32.totalorder %s31, 1
      %p301 = scmp.ne.s32.totalorder %s296, %s298
      %p302 = scmp.eq.s32.totalorder %s31, 0
      %p303 = por %p301, %p302
      %p304 = scmp.ne.s32.totalorder %s296, %s298
      %p305 = scmp.eq.s32.totalorder %s36, 1
      %p306 = por %p304, %p305
      %p307 = scmp.ne.s32.totalorder %s298, %s299
      %p308 = scmp.eq.s32.totalorder %s36, 0
      %p309 = por %p307, %p308
      %p310 = scmp.ne.s32.totalorder %s298, %s299
      %p311 = scmp.eq.s32.totalorder %s37, 1
      %p312 = por %p310, %p311
      %p314 = scmp.ne.s32.totalorder %s299, %s313
      %p315 = scmp.eq.s32.totalorder %s37, 0
      %p316 = por %p314, %p315
      %s317 = ssub.s32 %s31, %s38
      %p318 = scmp.eq.s32.totalorder %s317, 0
      %s320 = sadd.s32 %s319, 1
      %s321 = scalar_select %p318, %s319, %s320
      %p324 = pneg %p318
      %p325 = scmp.eq.s32.totalorder %s31, 1
      %p326 = por %p324, %p325
      %p327 = scmp.ne.s32.totalorder %s319, %s322
      %p328 = scmp.eq.s32.totalorder %s31, 0
      %p329 = por %p327, %p328
      %p330 = scmp.ne.s32.totalorder %s319, %s322
      %p331 = scmp.eq.s32.totalorder %s36, 1
      %p332 = por %p330, %p331
      %p333 = scmp.ne.s32.totalorder %s322, %s323
      %p334 = scmp.eq.s32.totalorder %s36, 0
      %p335 = por %p333, %p334
      %p336 = scmp.ne.s32.totalorder %s322, %s323
      %p337 = scmp.eq.s32.totalorder %s37, 1
      %p338 = por %p336, %p337
      %p340 = scmp.ne.s32.totalorder %s323, %s339
      %p341 = scmp.eq.s32.totalorder %s37, 0
      %p342 = por %p340, %p341
      %s343 = ssub.s32 %s31, %s38
      %p344 = scmp.eq.s32.totalorder %s343, 0
      %s346 = sadd.s32 %s345, 1
      %s347 = scalar_select %p344, %s345, %s346
      %p350 = pneg %p344
      %p351 = scmp.eq.s32.totalorder %s31, 1
      %p352 = por %p350, %p351
      %p353 = scmp.ne.s32.totalorder %s345, %s348
      %p354 = scmp.eq.s32.totalorder %s31, 0
      %p355 = por %p353, %p354
      %p356 = scmp.ne.s32.totalorder %s345, %s348
      %p357 = scmp.eq.s32.totalorder %s36, 1
      %p358 = por %p356, %p357
      %p359 = scmp.ne.s32.totalorder %s348, %s349
      %p360 = scmp.eq.s32.totalorder %s36, 0
      %p361 = por %p359, %p360
      %p362 = scmp.ne.s32.totalorder %s348, %s349
      %p363 = scmp.eq.s32.totalorder %s37, 1
      %p364 = por %p362, %p363
      %p366 = scmp.ne.s32.totalorder %s349, %s365
      %p367 = scmp.eq.s32.totalorder %s37, 0
      %p368 = por %p366, %p367
      %p369 = scmp.le.s32.totalorder 1, %s31
      %p370 = scmp.lt.s32.totalorder %s31, 3
      %p371 = pnand %p369, %p370
      %p372 = pneg %p371
      // Predicated region
      $region9: #{depth_conv1d_forward.1} parent=5 // pred_check
        _
      $region10: #{depth_conv1d_forward.1} parent=5 // pred_check_branch
        %374 = sbr.rel (%p371) target = $region12
      $region11: #{depth_conv1d_forward.1} parent=5 // pred_region
        %s375 = ssub.s32 %s31, 1
        // Predicated region
        $region13: #{depth_conv1d_forward.1} parent=11 // pred_check
          %p376 = pneg %p78
        $region14: #{depth_conv1d_forward.1} parent=11 // pred_check_branch
          %378 = sbr.rel (%p376) target = $region16
        $region15: #{depth_conv1d_forward.1} parent=11 // pred_region
          _
        $region16: #{depth_conv1d_forward.1} parent=11 // pred_fallthru
          _
        // Predicated region
        $region17: #{depth_conv1d_forward.1} parent=11 // pred_check
          %p379 = pneg %p99
        $region18: #{depth_conv1d_forward.1} parent=11 // pred_check_branch
          %381 = sbr.rel (%p379) target = $region20
        $region19: #{depth_conv1d_forward.1} parent=11 // pred_region
          _
        $region20: #{depth_conv1d_forward.1} parent=11 // pred_fallthru
          _
        // Predicated region
        $region21: #{depth_conv1d_forward.1} parent=11 // pred_check
          %p382 = pneg %p120
        $region22: #{depth_conv1d_forward.1} parent=11 // pred_check_branch
          %384 = sbr.rel (%p382) target = $region24
        $region23: #{depth_conv1d_forward.1} parent=11 // pred_region
          _
        $region24: #{depth_conv1d_forward.1} parent=11 // pred_fallthru
          _
        // Predicated region
        $region25: #{depth_conv1d_forward.1} parent=11 // pred_check
          %p385 = pneg %p141
        $region26: #{depth_conv1d_forward.1} parent=11 // pred_check_branch
          %387 = sbr.rel (%p385) target = $region28
        $region27: #{depth_conv1d_forward.1} parent=11 // pred_region
          _
        $region28: #{depth_conv1d_forward.1} parent=11 // pred_fallthru
          _
        // Predicated region
        $region29: #{depth_conv1d_forward.1} parent=11 // pred_check
          %p388 = pneg %p162
        $region30: #{depth_conv1d_forward.1} parent=11 // pred_check_branch
          %390 = sbr.rel (%p388) target = $region32
        $region31: #{depth_conv1d_forward.1} parent=11 // pred_region
          _
        $region32: #{depth_conv1d_forward.1} parent=11 // pred_fallthru
          _
        // Predicated region
        $region33: #{depth_conv1d_forward.1} parent=11 // pred_check
          %p391 = pneg %p183
        $region34: #{depth_conv1d_forward.1} parent=11 // pred_check_branch
          %393 = sbr.rel (%p391) target = $region36
        $region35: #{depth_conv1d_forward.1} parent=11 // pred_region
          _
        $region36: #{depth_conv1d_forward.1} parent=11 // pred_fallthru
          _
        // Predicated region
        $region37: #{depth_conv1d_forward.1} parent=11 // pred_check
          %p394 = pneg %p204
        $region38: #{depth_conv1d_forward.1} parent=11 // pred_check_branch
          %396 = sbr.rel (%p394) target = $region40
        $region39: #{depth_conv1d_forward.1} parent=11 // pred_region
          _
        $region40: #{depth_conv1d_forward.1} parent=11 // pred_fallthru
          _
        // Predicated region
        $region41: #{depth_conv1d_forward.1} parent=11 // pred_check
          %p397 = pneg %p225
        $region42: #{depth_conv1d_forward.1} parent=11 // pred_check_branch
          %399 = sbr.rel (%p397) target = $region44
        $region43: #{depth_conv1d_forward.1} parent=11 // pred_region
          _
        $region44: #{depth_conv1d_forward.1} parent=11 // pred_fallthru
          _
        // Predicated region
        $region45: #{depth_conv1d_forward.1} parent=11 // pred_check
          %p400 = pneg %p246
        $region46: #{depth_conv1d_forward.1} parent=11 // pred_check_branch
          %402 = sbr.rel (%p400) target = $region48
        $region47: #{depth_conv1d_forward.1} parent=11 // pred_region
          _
        $region48: #{depth_conv1d_forward.1} parent=11 // pred_fallthru
          _
        // Predicated region
        $region49: #{depth_conv1d_forward.1} parent=11 // pred_check
          %p403 = pneg %p267
        $region50: #{depth_conv1d_forward.1} parent=11 // pred_check_branch
          %405 = sbr.rel (%p403) target = $region52
        $region51: #{depth_conv1d_forward.1} parent=11 // pred_region
          _
        $region52: #{depth_conv1d_forward.1} parent=11 // pred_fallthru
          _
        // Predicated region
        $region53: #{depth_conv1d_forward.1} parent=11 // pred_check
          %p406 = pneg %p288
        $region54: #{depth_conv1d_forward.1} parent=11 // pred_check_branch
          %408 = sbr.rel (%p406) target = $region56
        $region55: #{depth_conv1d_forward.1} parent=11 // pred_region
          _
        $region56: #{depth_conv1d_forward.1} parent=11 // pred_fallthru
          _
        // Predicated region
        $region57: #{depth_conv1d_forward.1} parent=11 // pred_check
          %p409 = pneg %p309
        $region58: #{depth_conv1d_forward.1} parent=11 // pred_check_branch
          %411 = sbr.rel (%p409) target = $region60
        $region59: #{depth_conv1d_forward.1} parent=11 // pred_region
          _
        $region60: #{depth_conv1d_forward.1} parent=11 // pred_fallthru
          _
      $region12: #{depth_conv1d_forward.1} parent=5 // pred_fallthru
        _
      %p412 = scmp.lt.s32.totalorder %s31, 2
      // Predicated region
      $region61: #{depth_conv1d_forward.1} parent=5 // pred_check
        %p413 = pneg %p412
      $region62: #{depth_conv1d_forward.1} parent=5 // pred_check_branch
        %415 = sbr.rel (%p413) target = $region64
      $region63: #{depth_conv1d_forward.1} parent=5 // pred_region
        // Predicated region
        $region65: #{depth_conv1d_forward.1} parent=63 // pred_check
          %p416 = pneg %p51
        $region66: #{depth_conv1d_forward.1} parent=63 // pred_check_branch
          %418 = sbr.rel (%p416) target = $region68
        $region67: #{depth_conv1d_forward.1} parent=63 // pred_region
          %p419 = scmp.lt.s32.totalorder %s31, 1
          %s420 = scalar_select %p419, %s31, 1
          %s421 = smul.addr %s420, 4
          %s422 = smul.addr %s421, 8
          %s423 = scalar_lea.vmem %s0, %s422
        $region68: #{depth_conv1d_forward.1} parent=63 // pred_fallthru
          _
      $region64: #{depth_conv1d_forward.1} parent=5 // pred_fallthru
        _
      %p424 = scmp.le.s32.totalorder 1, %s31
      %p425 = scmp.lt.s32.totalorder %s31, 3
      %p426 = pnand %p424, %p425
      %p427 = pneg %p426
      // Predicated region
      $region69: #{depth_conv1d_forward.1} parent=5 // pred_check
        _
      $region70: #{depth_conv1d_forward.1} parent=5 // pred_check_branch
        %429 = sbr.rel (%p426) target = $region72
      $region71: #{depth_conv1d_forward.1} parent=5 // pred_region
        %s430 = ssub.s32 %s31, 1
        %p431 = scmp.lt.s32.totalorder %s36, 1
        %s432 = scalar_select %p431, %s36, 1
        %s433 = smul.addr %s432, 4
        %s434 = smul.addr %s433, 8
        %s435 = scalar_lea.vmem %s0, %s434
        %p436 = pneg %p57
        %p437 = pneg %p54
        %p438 = pneg %p78
        %p439 = pneg %p75
        %p440 = pneg %p99
        %p441 = pneg %p96
        %p442 = pneg %p120
        %p443 = pneg %p117
        %p444 = pneg %p141
        %p445 = pneg %p138
        %p446 = pneg %p162
        %p447 = pneg %p159
        %p448 = pneg %p183
        %p449 = pneg %p180
        %p450 = pneg %p204
        %p451 = pneg %p201
        %p452 = pneg %p225
        %p453 = pneg %p222
        %p454 = pneg %p246
        %p455 = pneg %p243
        %p456 = pneg %p267
        %p457 = pneg %p264
        %p458 = pneg %p288
        %p459 = pneg %p285
        %p460 = pneg %p309
        %p461 = pneg %p306
        %p462 = pneg %p335
        %p463 = pneg %p332
        %s464 = sand.u32 %s322, 1
        %s465 = scalar_lea.sflag [#allocation6], %s464
        %s466 = sand.u32 %s322, 1
        %s467 = smul.addr %s466, 32
        %s468 = scalar_lea.vmem [#allocation5], %s467
        %p469 = pneg %p361
        %p470 = pneg %p358
        %s471 = sand.u32 %s348, 1
        %s472 = scalar_lea.sflag [#allocation8], %s471
        %s473 = sand.u32 %s348, 1
        %s474 = smul.addr %s473, 32
        %s475 = scalar_lea.vmem [#allocation7], %s474
        %p476 = scmp.lt.s32.totalorder %s36, 1
        %s477 = scalar_select %p476, %s36, 1
        %s478 = smul.addr %s477, 4
        %s479 = smul.addr %s478, 8
        %s480 = scalar_lea.vmem %s0, %s479
        %v481 = vld [vmem:[%s480] sm:$0xff]
        %v482 = vld [vmem:[%s480 + $0x8] sm:$0xff]
        %v483 = vld [vmem:[%s480 + $0x10] sm:$0xff]
        %v484 = vld [vmem:[%s480 + $0x18] sm:$0xff]
        %v485 = vld [vmem:[%s1] sm:$0xff]
        %v486 = vld [vmem:[%s1 + $0x8] sm:$0xff]
        %v487 = vld [vmem:[%s1 + $0x10] sm:$0xff]
        %v488 = vld [vmem:[%s1 + $0x18] sm:$0xff]
        %v489 = vld [vmem:[%s1 + $0x20] sm:$0xff]
        %v490 = vld [vmem:[%s1 + $0x28] sm:$0xff]
        %v491 = vld [vmem:[%s1 + $0x30] sm:$0xff]
        %v492 = vld [vmem:[%s1 + $0x38] sm:$0xff]
        %v493 = vld [vmem:[%s2] sm:$0xff]
        %v494 = vld [vmem:[%s2 + $0x8] sm:$0xff]
        %v495 = vld [vmem:[%s2 + $0x10] sm:$0xff]
        %v496 = vld [vmem:[%s2 + $0x18] sm:$0xff]
        %v497 = vld [vmem:[%s2 + $0x20] sm:$0xff]
        %v498 = vld [vmem:[%s2 + $0x28] sm:$0xff]
        %v499 = vld [vmem:[%s2 + $0x30] sm:$0xff]
        %v500 = vld [vmem:[%s2 + $0x38] sm:$0xff]
        %502 = vset.pattern.permute.xlu0 0
        %503 = vperm.xlu0 %502, %v493
        %v504 = vpop.permute.xlu0 %503
        %507 = vset.pattern.permute.xlu0 0
        %508 = vperm.xlu0 %507, %v494
        %v509 = vpop.permute.xlu0 %508
        %512 = vset.pattern.permute.xlu0 0
        %513 = vperm.xlu0 %512, %v495
        %v514 = vpop.permute.xlu0 %513
        %517 = vset.pattern.permute.xlu0 0
        %518 = vperm.xlu0 %517, %v496
        %v519 = vpop.permute.xlu0 %518
        %522 = vset.pattern.permute.xlu0 0
        %523 = vperm.xlu0 %522, %v497
        %v524 = vpop.permute.xlu0 %523
        %527 = vset.pattern.permute.xlu0 0
        %528 = vperm.xlu0 %527, %v498
        %v529 = vpop.permute.xlu0 %528
        %532 = vset.pattern.permute.xlu0 0
        %533 = vperm.xlu0 %532, %v499
        %v534 = vpop.permute.xlu0 %533
        %537 = vset.pattern.permute.xlu0 0
        %538 = vperm.xlu0 %537, %v500
        %v539 = vpop.permute.xlu0 %538
        %vm541 = vcmask 261120
        %v543 = vsel %vm541, %v485, 0
        %v546 = vsel %vm541, %v486, 0
        %v549 = vsel %vm541, %v487, 0
        %v552 = vsel %vm541, %v488, 0
        %v555 = vsel %vm541, %v489, 0
        %v558 = vsel %vm541, %v490, 0
        %v561 = vsel %vm541, %v491, 0
        %v564 = vsel %vm541, %v492, 0
        %566 = vmatprep.subr.mxu0 0.0
        %567 = vmatpush1.msra.mxu0 %v481
        %568 = vmatprep.subr.mxu0 0.0
        %569 = vmatpush1.msra.mxu0 %v482
        %570 = vmatprep.subr.mxu0 0.0
        %571 = vmatpush1.msra.mxu0 %v483
        %572 = vmatprep.subr.mxu0 0.0
        %573 = vmatpush1.msra.mxu0 %v484
        %574 = vmatprep.subr.mxu0 0.0
        %575 = vmatpush1.msra.mxu0 0.0
        %576 = vmatprep.subr.mxu0 0.0
        %577 = vmatpush1.msra.mxu0 0.0
        %578 = vmatprep.subr.mxu0 0.0
        %579 = vmatpush1.msra.mxu0 0.0
        %580 = vmatprep.subr.mxu0 0.0
        %581 = vmatpush1.msra.mxu0 0.0
        %582 = vmatprep.subr.mxu0 0.0
        %583 = vmatpush1.msra.mxu0 0.0
        %584 = vmatprep.subr.mxu0 0.0
        %585 = vmatpush1.msra.mxu0 0.0
        %586 = vmatprep.subr.mxu0 0.0
        %587 = vmatpush1.msra.mxu0 0.0
        %588 = vmatprep.subr.mxu0 0.0
        %589 = vmatpush1.msra.mxu0 0.0
        %590 = vmatprep.subr.mxu0 0.0
        %591 = vmatpush1.msra.mxu0 0.0
        %592 = vmatprep.subr.mxu0 0.0
        %593 = vmatpush1.msra.mxu0 0.0
        %594 = vmatprep.subr.mxu0 0.0
        %595 = vmatpush1.msra.mxu0 0.0
        %596 = vmatprep.subr.mxu0 0.0
        %597 = vmatpush1.msra.mxu0 0.0
        %598 = vmatprep.subr.mxu0 0.0
        %599 = vmatpush1.msra.mxu0 0.0
        %600 = vmatprep.subr.mxu0 0.0
        %601 = vmatpush1.msra.mxu0 0.0
        %602 = vmatprep.subr.mxu0 0.0
        %603 = vmatpush1.msra.mxu0 0.0
        %604 = vmatprep.subr.mxu0 0.0
        %605 = vmatpush1.msra.mxu0 0.0
        %606 = vmatprep.subr.mxu0 0.0
        %607 = vmatpush1.msra.mxu0 0.0
        %608 = vmatprep.subr.mxu0 0.0
        %609 = vmatpush1.msra.mxu0 0.0
        %610 = vmatprep.subr.mxu0 0.0
        %611 = vmatpush1.msra.mxu0 0.0
        %612 = vmatprep.subr.mxu0 0.0
        %613 = vmatpush1.msra.mxu0 0.0
        %614 = vmatprep.subr.mxu0 0.0
        %615 = vmatpush1.msra.mxu0 0.0
        %616 = vmatprep.subr.mxu0 0.0
        %617 = vmatpush1.msra.mxu0 0.0
        %618 = vmatprep.subr.mxu0 0.0
        %619 = vmatpush1.msra.mxu0 0.0
        %620 = vmatprep.subr.mxu0 0.0
        %621 = vmatpush1.msra.mxu0 0.0
        %622 = vmatprep.subr.mxu0 0.0
        %623 = vmatpush1.msra.mxu0 0.0
        %624 = vmatprep.subr.mxu0 0.0
        %625 = vmatpush1.msra.mxu0 0.0
        %626 = vmatprep.subr.mxu0 0.0
        %627 = vmatpush1.msra.mxu0 0.0
        %628 = vmatprep.subr.mxu0 0.0
        %629 = vmatpush1.msra.mxu0 0.0
        %630 = vmatprep.mubr.f32.mxu0 0.0
        %631 = vmatmul.mubr.f32.gmra.mrb[0].mxu0 %v543
        %v632 = vpop.f32.mrb[0].mxu0
        %v633 = vadd.f32 %v504, %v632
        %v634 = vpop.f32.mrb[0].mxu0
        %635 = vmatprep.mubr.f32.mxu0 0.0
        %636 = vmatmul.mubr.f32.gmra.mrb[0].mxu0 %v546
        %v637 = vpop.f32.mrb[0].mxu0
        %v638 = vadd.f32 %v509, %v637
        %v639 = vpop.f32.mrb[0].mxu0
        %640 = vmatprep.mubr.f32.mxu0 0.0
        %641 = vmatmul.mubr.f32.gmra.mrb[0].mxu0 %v549
        %v642 = vpop.f32.mrb[0].mxu0
        %v643 = vadd.f32 %v514, %v642
        %v644 = vpop.f32.mrb[0].mxu0
        %645 = vmatprep.mubr.f32.mxu0 0.0
        %646 = vmatmul.mubr.f32.gmra.mrb[0].mxu0 %v552
        %v647 = vpop.f32.mrb[0].mxu0
        %v648 = vadd.f32 %v519, %v647
        %v649 = vpop.f32.mrb[0].mxu0
        %650 = vmatprep.mubr.f32.mxu0 0.0
        %651 = vmatmul.mubr.f32.gmra.mrb[0].mxu0 %v555
        %v652 = vpop.f32.mrb[0].mxu0
        %v653 = vadd.f32 %v524, %v652
        %v654 = vpop.f32.mrb[0].mxu0
        %655 = vmatprep.mubr.f32.mxu0 0.0
        %656 = vmatmul.mubr.f32.gmra.mrb[0].mxu0 %v558
        %v657 = vpop.f32.mrb[0].mxu0
        %v658 = vadd.f32 %v529, %v657
        %v659 = vpop.f32.mrb[0].mxu0
        %660 = vmatprep.mubr.f32.mxu0 0.0
        %661 = vmatmul.mubr.f32.gmra.mrb[0].mxu0 %v561
        %v662 = vpop.f32.mrb[0].mxu0
        %v663 = vadd.f32 %v534, %v662
        %v664 = vpop.f32.mrb[0].mxu0
        %665 = vmatprep.mubr.f32.mxu0 0.0
        %666 = vmatmul.mubr.f32.gmra.mrb[0].mxu0 %v564
        %v667 = vpop.f32.mrb[0].mxu0
        %v668 = vadd.f32 %v539, %v667
        %v669 = vpop.f32.mrb[0].mxu0
        %670 = vdwg.mxu0
        %vm671 = vcmp.ge.f32.partialorder %v633, 0.0
        %vm672 = vcmp.ge.f32.partialorder %v638, 0.0
        %vm673 = vcmp.ge.f32.partialorder %v643, 0.0
        %vm674 = vcmp.ge.f32.partialorder %v648, 0.0
        %vm675 = vcmp.ge.f32.partialorder %v653, 0.0
        %vm676 = vcmp.ge.f32.partialorder %v658, 0.0
        %vm677 = vcmp.ge.f32.partialorder %v663, 0.0
        %vm678 = vcmp.ge.f32.partialorder %v668, 0.0
        %v679 = vld [vmem:[#allocation3] sm:$0x1]
        %v681 = vlaneseq
        %v682 = vshrl.u32 %v681, 7
        %v683 = vsub.s32 0, %v682
        %v684 = vrot.slane %v679, %v683
        %685 = vset.pattern.permute.xlu0 0
        %686 = vperm.xlu0 %685, %v684
        %v687 = vpop.permute.xlu0 %686
        %v689 = vmul.f32 %v687, %v633
        %v690 = vmul.f32 %v687, %v638
        %v691 = vmul.f32 %v687, %v643
        %v692 = vmul.f32 %v687, %v648
        %v693 = vmul.f32 %v687, %v653
        %v694 = vmul.f32 %v687, %v658
        %v695 = vmul.f32 %v687, %v663
        %v696 = vmul.f32 %v687, %v668
        %v697 = vsel %vm671, %v633, %v689
        %v698 = vsel %vm672, %v638, %v690
        %v699 = vsel %vm673, %v643, %v691
        %v700 = vsel %vm674, %v648, %v692
        %v701 = vsel %vm675, %v653, %v693
        %v702 = vsel %vm676, %v658, %v694
        %v703 = vsel %vm677, %v663, %v695
        %v704 = vsel %vm678, %v668, %v696
        %v705 = vadd.f32 %v697, %v698
        %v706 = vadd.f32 %v705, %v699
        %v707 = vadd.f32 %v706, %v700
        %v708 = vadd.f32 %v707, %v701
        %v709 = vadd.f32 %v708, %v702
        %v710 = vadd.f32 %v709, %v703
        %v711 = vadd.f32 %v710, %v704
        %712 = vadd.xlane.f32.xlu0 %v711
        %v713 = vpop.xlane.xlu0 %712
        %v714 = vrot.slane %v713, 4
        %v715 = vadd.f32 %v713, %v714
        %v716 = vrot.slane %v715, 2
        %v717 = vadd.f32 %v715, %v716
        %v718 = vrot.slane %v717, 1
        %v719 = vadd.f32 %v717, %v718
        %s720 = vtos %v719
        %v721 = vmul.f32 %v697, %v697
        %v722 = vmul.f32 %v698, %v698
        %v723 = vmul.f32 %v699, %v699
        %v724 = vmul.f32 %v700, %v700
        %v725 = vmul.f32 %v701, %v701
        %v726 = vmul.f32 %v702, %v702
        %v727 = vmul.f32 %v703, %v703
        %v728 = vmul.f32 %v704, %v704
        %v729 = vadd.f32 %v721, %v722
        %v730 = vadd.f32 %v729, %v723
        %v731 = vadd.f32 %v730, %v724
        %v732 = vadd.f32 %v731, %v725
        %v733 = vadd.f32 %v732, %v726
        %v734 = vadd.f32 %v733, %v727
        %v735 = vadd.f32 %v734, %v728
        %736 = vadd.xlane.f32.xlu0 %v735
        %v737 = vpop.xlane.xlu0 %736
        %v738 = vrot.slane %v737, 4
        %v739 = vadd.f32 %v737, %v738
        %v740 = vrot.slane %v739, 2
        %v741 = vadd.f32 %v739, %v740
        %v742 = vrot.slane %v741, 1
        %v743 = vadd.f32 %v741, %v742
        %s744 = vtos %v743
        %s745 = smul.f32 %s720, 0.00012207031
        %s746 = smul.f32 %s744, 0.00012207031
        %s747 = smul.f32 %s745, %s745
        %s748 = ssub.f32 %s746, %s747
        %v749 = vld [vmem:[%s4] sm:$0xff]
        %v750 = vld [vmem:[%s4 + $0x8] sm:$0xff]
        %v751 = vld [vmem:[%s4 + $0x10] sm:$0xff]
        %v752 = vld [vmem:[%s4 + $0x18] sm:$0xff]
        %v753 = vld [vmem:[%s4 + $0x20] sm:$0xff]
        %v754 = vld [vmem:[%s4 + $0x28] sm:$0xff]
        %v755 = vld [vmem:[%s4 + $0x30] sm:$0xff]
        %v756 = vld [vmem:[%s4 + $0x38] sm:$0xff]
        %s757 = sadd.f32 %s748, 1e-08
        %v758 = vstv %s757
        %v759 = vrsqrt.pop %v758
        %s760 = vtos %v759
        %v761 = vstv %s760
        %v762 = vmul.f32 %v749, %v761
        %v763 = vmul.f32 %v750, %v761
        %v764 = vmul.f32 %v751, %v761
        %v765 = vmul.f32 %v752, %v761
        %v766 = vmul.f32 %v753, %v761
        %v767 = vmul.f32 %v754, %v761
        %v768 = vmul.f32 %v755, %v761
        %v769 = vmul.f32 %v756, %v761
        %v770 = vld [vmem:[%s5] sm:$0xff]
        %v771 = vld [vmem:[%s5 + $0x8] sm:$0xff]
        %v772 = vld [vmem:[%s5 + $0x10] sm:$0xff]
        %v773 = vld [vmem:[%s5 + $0x18] sm:$0xff]
        %v774 = vld [vmem:[%s5 + $0x20] sm:$0xff]
        %v775 = vld [vmem:[%s5 + $0x28] sm:$0xff]
        %v776 = vld [vmem:[%s5 + $0x30] sm:$0xff]
        %v777 = vld [vmem:[%s5 + $0x38] sm:$0xff]
        %v778 = vstv %s745
        %v779 = vmul.f32 %v778, %v762
        %v780 = vmul.f32 %v778, %v763
        %v781 = vmul.f32 %v778, %v764
        %v782 = vmul.f32 %v778, %v765
        %v783 = vmul.f32 %v778, %v766
        %v784 = vmul.f32 %v778, %v767
        %v785 = vmul.f32 %v778, %v768
        %v786 = vmul.f32 %v778, %v769
        %v787 = vsub.f32 %v770, %v779
        %v788 = vsub.f32 %v771, %v780
        %v789 = vsub.f32 %v772, %v781
        %v790 = vsub.f32 %v773, %v782
        %v791 = vsub.f32 %v774, %v783
        %v792 = vsub.f32 %v775, %v784
        %v793 = vsub.f32 %v776, %v785
        %v794 = vsub.f32 %v777, %v786
        %796 = vset.pattern.permute.xlu0 0
        %797 = vperm.xlu0 %796, %v762
        %v798 = vpop.permute.xlu0 %797
        %801 = vset.pattern.permute.xlu0 0
        %802 = vperm.xlu0 %801, %v763
        %v803 = vpop.permute.xlu0 %802
        %806 = vset.pattern.permute.xlu0 0
        %807 = vperm.xlu0 %806, %v764
        %v808 = vpop.permute.xlu0 %807
        %811 = vset.pattern.permute.xlu0 0
        %812 = vperm.xlu0 %811, %v765
        %v813 = vpop.permute.xlu0 %812
        %816 = vset.pattern.permute.xlu0 0
        %817 = vperm.xlu0 %816, %v766
        %v818 = vpop.permute.xlu0 %817
        %821 = vset.pattern.permute.xlu0 0
        %822 = vperm.xlu0 %821, %v767
        %v823 = vpop.permute.xlu0 %822
        %826 = vset.pattern.permute.xlu0 0
        %827 = vperm.xlu0 %826, %v768
        %v828 = vpop.permute.xlu0 %827
        %831 = vset.pattern.permute.xlu0 0
        %832 = vperm.xlu0 %831, %v769
        %v833 = vpop.permute.xlu0 %832
        %v835 = vmul.f32 %v697, %v798
        %v836 = vmul.f32 %v698, %v803
        %v837 = vmul.f32 %v699, %v808
        %v838 = vmul.f32 %v700, %v813
        %v839 = vmul.f32 %v701, %v818
        %v840 = vmul.f32 %v702, %v823
        %v841 = vmul.f32 %v703, %v828
        %v842 = vmul.f32 %v704, %v833
        %844 = vset.pattern.permute.xlu0 0
        %845 = vperm.xlu0 %844, %v787
        %v846 = vpop.permute.xlu0 %845
        %849 = vset.pattern.permute.xlu0 0
        %850 = vperm.xlu0 %849, %v788
        %v851 = vpop.permute.xlu0 %850
        %854 = vset.pattern.permute.xlu0 0
        %855 = vperm.xlu0 %854, %v789
        %v856 = vpop.permute.xlu0 %855
        %859 = vset.pattern.permute.xlu0 0
        %860 = vperm.xlu0 %859, %v790
        %v861 = vpop.permute.xlu0 %860
        %864 = vset.pattern.permute.xlu0 0
        %865 = vperm.xlu0 %864, %v791
        %v866 = vpop.permute.xlu0 %865
        %869 = vset.pattern.permute.xlu0 0
        %870 = vperm.xlu0 %869, %v792
        %v871 = vpop.permute.xlu0 %870
        %874 = vset.pattern.permute.xlu0 0
        %875 = vperm.xlu0 %874, %v793
        %v876 = vpop.permute.xlu0 %875
        %879 = vset.pattern.permute.xlu0 0
        %880 = vperm.xlu0 %879, %v794
        %v881 = vpop.permute.xlu0 %880
        %v883 = vadd.f32 %v835, %v846
        %v884 = vadd.f32 %v836, %v851
        %v885 = vadd.f32 %v837, %v856
        %v886 = vadd.f32 %v838, %v861
        %v887 = vadd.f32 %v839, %v866
        %v888 = vadd.f32 %v840, %v871
        %v889 = vadd.f32 %v841, %v876
        %v890 = vadd.f32 %v842, %v881
        %vm891 = vcmask 7168
        %892 = vst.msk [vmem:[#allocation2] sm:$0xff] %vm891, 0.0
        %893 = vst.msk [vmem:[#allocation2 + $0x10] sm:$0xff] %vm891, 0.0
        %894 = vst.msk [vmem:[#allocation2 + $0x20] sm:$0xff] %vm891, 0.0
        %895 = vst.msk [vmem:[#allocation2 + $0x30] sm:$0xff] %vm891, 0.0
        %896 = vst.msk [vmem:[#allocation2 + $0x40] sm:$0xff] %vm891, 0.0
        %897 = vst.msk [vmem:[#allocation2 + $0x50] sm:$0xff] %vm891, 0.0
        %898 = vst.msk [vmem:[#allocation2 + $0x60] sm:$0xff] %vm891, 0.0
        %899 = vst.msk [vmem:[#allocation2 + $0x70] sm:$0xff] %vm891, 0.0
        %vm900 = vcmask 15368
        %901 = vst.msk [vmem:[#allocation2 + $0x8] sm:$0xff] %vm900, 0.0
        %902 = vst.msk [vmem:[#allocation2 + $0x18] sm:$0xff] %vm900, 0.0
        %903 = vst.msk [vmem:[#allocation2 + $0x28] sm:$0xff] %vm900, 0.0
        %904 = vst.msk [vmem:[#allocation2 + $0x38] sm:$0xff] %vm900, 0.0
        %905 = vst.msk [vmem:[#allocation2 + $0x48] sm:$0xff] %vm900, 0.0
        %906 = vst.msk [vmem:[#allocation2 + $0x58] sm:$0xff] %vm900, 0.0
        %907 = vst.msk [vmem:[#allocation2 + $0x68] sm:$0xff] %vm900, 0.0
        %908 = vst.msk [vmem:[#allocation2 + $0x78] sm:$0xff] %vm900, 0.0
        %917 = vrot.lane.b32.xlu0 %v883, 1
        %v918 = vpop.permute.xlu0 %917
        %919 = vrot.lane.b32.xlu0 %v884, 1
        %v920 = vpop.permute.xlu0 %919
        %921 = vrot.lane.b32.xlu0 %v885, 1
        %v922 = vpop.permute.xlu0 %921
        %923 = vrot.lane.b32.xlu0 %v886, 1
        %v924 = vpop.permute.xlu0 %923
        %925 = vrot.lane.b32.xlu0 %v887, 1
        %v926 = vpop.permute.xlu0 %925
        %927 = vrot.lane.b32.xlu0 %v888, 1
        %v928 = vpop.permute.xlu0 %927
        %929 = vrot.lane.b32.xlu0 %v889, 1
        %v930 = vpop.permute.xlu0 %929
        %931 = vrot.lane.b32.xlu0 %v890, 1
        %v932 = vpop.permute.xlu0 %931
        %vm941 = vcmask 1047560
        %942 = vst.msk [vmem:[#allocation2] sm:$0xff] %vm941, %v918
        %943 = vst.msk [vmem:[#allocation2 + $0x8] sm:$0xff] %vm891, %v918
        %944 = vst.msk [vmem:[#allocation2 + $0x10] sm:$0xff] %vm941, %v920
        %945 = vst.msk [vmem:[#allocation2 + $0x18] sm:$0xff] %vm891, %v920
        %946 = vst.msk [vmem:[#allocation2 + $0x20] sm:$0xff] %vm941, %v922
        %947 = vst.msk [vmem:[#allocation2 + $0x28] sm:$0xff] %vm891, %v922
        %948 = vst.msk [vmem:[#allocation2 + $0x30] sm:$0xff] %vm941, %v924
        %949 = vst.msk [vmem:[#allocation2 + $0x38] sm:$0xff] %vm891, %v924
        %950 = vst.msk [vmem:[#allocation2 + $0x40] sm:$0xff] %vm941, %v926
        %951 = vst.msk [vmem:[#allocation2 + $0x48] sm:$0xff] %vm891, %v926
        %952 = vst.msk [vmem:[#allocation2 + $0x50] sm:$0xff] %vm941, %v928
        %953 = vst.msk [vmem:[#allocation2 + $0x58] sm:$0xff] %vm891, %v928
        %954 = vst.msk [vmem:[#allocation2 + $0x60] sm:$0xff] %vm941, %v930
        %955 = vst.msk [vmem:[#allocation2 + $0x68] sm:$0xff] %vm891, %v930
        %956 = vst.msk [vmem:[#allocation2 + $0x70] sm:$0xff] %vm941, %v932
        %957 = vst.msk [vmem:[#allocation2 + $0x78] sm:$0xff] %vm891, %v932
        %v958 = vld [vmem:[%s6] sm:$0xff]
        %v959 = vld [vmem:[%s6 + $0x8] sm:$0xff]
        %v960 = vld [vmem:[%s6 + $0x10] sm:$0xff]
        %v961 = vld [vmem:[%s6 + $0x18] sm:$0xff]
        %v962 = vld [vmem:[%s6 + $0x20] sm:$0xff]
        %v963 = vld [vmem:[%s6 + $0x28] sm:$0xff]
        %v964 = vld [vmem:[%s6 + $0x30] sm:$0xff]
        %v965 = vld [vmem:[%s6 + $0x38] sm:$0xff]
        %v966 = vld [vmem:[#allocation2] sm:$0xff]
        %v967 = vld [vmem:[#allocation2 + $0x10] sm:$0xff]
        %v968 = vld [vmem:[#allocation2 + $0x20] sm:$0xff]
        %v969 = vld [vmem:[#allocation2 + $0x30] sm:$0xff]
        %v970 = vld [vmem:[#allocation2 + $0x40] sm:$0xff]
        %v971 = vld [vmem:[#allocation2 + $0x50] sm:$0xff]
        %v972 = vld [vmem:[#allocation2 + $0x60] sm:$0xff]
        %v973 = vld [vmem:[#allocation2 + $0x70] sm:$0xff]
        %975 = vset.pattern.permute.xlu0 0
        %976 = vperm.xlu0 %975, %v958
        %v977 = vpop.permute.xlu0 %976
        %980 = vset.pattern.permute.xlu0 0
        %981 = vperm.xlu0 %980, %v959
        %v982 = vpop.permute.xlu0 %981
        %985 = vset.pattern.permute.xlu0 0
        %986 = vperm.xlu0 %985, %v960
        %v987 = vpop.permute.xlu0 %986
        %990 = vset.pattern.permute.xlu0 0
        %991 = vperm.xlu0 %990, %v961
        %v992 = vpop.permute.xlu0 %991
        %995 = vset.pattern.permute.xlu0 0
        %996 = vperm.xlu0 %995, %v962
        %v997 = vpop.permute.xlu0 %996
        %1000 = vset.pattern.permute.xlu0 0
        %1001 = vperm.xlu0 %1000, %v963
        %v1002 = vpop.permute.xlu0 %1001
        %1005 = vset.pattern.permute.xlu0 0
        %1006 = vperm.xlu0 %1005, %v964
        %v1007 = vpop.permute.xlu0 %1006
        %1010 = vset.pattern.permute.xlu0 0
        %1011 = vperm.xlu0 %1010, %v965
        %v1012 = vpop.permute.xlu0 %1011
        %v1014 = vmul.f32 %v977, %v966
        %v1015 = vmul.f32 %v982, %v967
        %v1016 = vmul.f32 %v987, %v968
        %v1017 = vmul.f32 %v992, %v969
        %v1018 = vmul.f32 %v997, %v970
        %v1019 = vmul.f32 %v1002, %v971
        %v1020 = vmul.f32 %v1007, %v972
        %v1021 = vmul.f32 %v1012, %v973
        %v1022 = vld [vmem:[#allocation2] sm:$0xff]
        %v1023 = vld [vmem:[#allocation2 + $0x8] sm:$0xff]
        %v1024 = vld [vmem:[#allocation2 + $0x10] sm:$0xff]
        %v1025 = vld [vmem:[#allocation2 + $0x18] sm:$0xff]
        %v1026 = vld [vmem:[#allocation2 + $0x20] sm:$0xff]
        %v1027 = vld [vmem:[#allocation2 + $0x28] sm:$0xff]
        %v1028 = vld [vmem:[#allocation2 + $0x30] sm:$0xff]
        %v1029 = vld [vmem:[#allocation2 + $0x38] sm:$0xff]
        %v1030 = vld [vmem:[#allocation2 + $0x40] sm:$0xff]
        %v1031 = vld [vmem:[#allocation2 + $0x48] sm:$0xff]
        %v1032 = vld [vmem:[#allocation2 + $0x50] sm:$0xff]
        %v1033 = vld [vmem:[#allocation2 + $0x58] sm:$0xff]
        %v1034 = vld [vmem:[#allocation2 + $0x60] sm:$0xff]
        %v1035 = vld [vmem:[#allocation2 + $0x68] sm:$0xff]
        %v1036 = vld [vmem:[#allocation2 + $0x70] sm:$0xff]
        %v1037 = vld [vmem:[#allocation2 + $0x78] sm:$0xff]
        %1038 = vset.pattern.permute.xlu0 1
        %1039 = vperm.xlu0 %1038, %v958
        %v1040 = vpop.permute.xlu0 %1039
        %1042 = vset.pattern.permute.xlu0 1
        %1043 = vperm.xlu0 %1042, %v959
        %v1044 = vpop.permute.xlu0 %1043
        %1046 = vset.pattern.permute.xlu0 1
        %1047 = vperm.xlu0 %1046, %v960
        %v1048 = vpop.permute.xlu0 %1047
        %1050 = vset.pattern.permute.xlu0 1
        %1051 = vperm.xlu0 %1050, %v961
        %v1052 = vpop.permute.xlu0 %1051
        %1054 = vset.pattern.permute.xlu0 1
        %1055 = vperm.xlu0 %1054, %v962
        %v1056 = vpop.permute.xlu0 %1055
        %1058 = vset.pattern.permute.xlu0 1
        %1059 = vperm.xlu0 %1058, %v963
        %v1060 = vpop.permute.xlu0 %1059
        %1062 = vset.pattern.permute.xlu0 1
        %1063 = vperm.xlu0 %1062, %v964
        %v1064 = vpop.permute.xlu0 %1063
        %1066 = vset.pattern.permute.xlu0 1
        %1067 = vperm.xlu0 %1066, %v965
        %v1068 = vpop.permute.xlu0 %1067
        %v1070 = vmul.f32 %v1040, %v1022
        %v1071 = vmul.f32 %v1040, %v1023
        %v1072 = vmul.f32 %v1044, %v1024
        %v1073 = vmul.f32 %v1044, %v1025
        %v1074 = vmul.f32 %v1048, %v1026
        %v1075 = vmul.f32 %v1048, %v1027
        %v1076 = vmul.f32 %v1052, %v1028
        %v1077 = vmul.f32 %v1052, %v1029
        %v1078 = vmul.f32 %v1056, %v1030
        %v1079 = vmul.f32 %v1056, %v1031
        %v1080 = vmul.f32 %v1060, %v1032
        %v1081 = vmul.f32 %v1060, %v1033
        %v1082 = vmul.f32 %v1064, %v1034
        %v1083 = vmul.f32 %v1064, %v1035
        %v1084 = vmul.f32 %v1068, %v1036
        %v1085 = vmul.f32 %v1068, %v1037
        %1102 = vrot.lane.b32.xlu0 %v1070, 127
        %v1103 = vpop.permute.xlu0 %1102
        %1104 = vrot.lane.b32.xlu0 %v1071, 127
        %v1105 = vpop.permute.xlu0 %1104
        %1106 = vrot.lane.b32.xlu0 %v1072, 127
        %v1107 = vpop.permute.xlu0 %1106
        %1108 = vrot.lane.b32.xlu0 %v1073, 127
        %v1109 = vpop.permute.xlu0 %1108
        %1110 = vrot.lane.b32.xlu0 %v1074, 127
        %v1111 = vpop.permute.xlu0 %1110
        %1112 = vrot.lane.b32.xlu0 %v1075, 127
        %v1113 = vpop.permute.xlu0 %1112
        %1114 = vrot.lane.b32.xlu0 %v1076, 127
        %v1115 = vpop.permute.xlu0 %1114
        %1116 = vrot.lane.b32.xlu0 %v1077, 127
        %v1117 = vpop.permute.xlu0 %1116
        %1118 = vrot.lane.b32.xlu0 %v1078, 127
        %v1119 = vpop.permute.xlu0 %1118
        %1120 = vrot.lane.b32.xlu0 %v1079, 127
        %v1121 = vpop.permute.xlu0 %1120
        %1122 = vrot.lane.b32.xlu0 %v1080, 127
        %v1123 = vpop.permute.xlu0 %1122
        %1124 = vrot.lane.b32.xlu0 %v1081, 127
        %v1125 = vpop.permute.xlu0 %1124
        %1126 = vrot.lane.b32.xlu0 %v1082, 127
        %v1127 = vpop.permute.xlu0 %1126
        %1128 = vrot.lane.b32.xlu0 %v1083, 127
        %v1129 = vpop.permute.xlu0 %1128
        %1130 = vrot.lane.b32.xlu0 %v1084, 127
        %v1131 = vpop.permute.xlu0 %1130
        %1132 = vrot.lane.b32.xlu0 %v1085, 127
        %v1133 = vpop.permute.xlu0 %1132
        %vm1134 = vcmask 1039360
        %v1135 = vsel %vm1134, %v1103, %v1105
        %v1136 = vsel %vm1134, %v1107, %v1109
        %v1137 = vsel %vm1134, %v1111, %v1113
        %v1138 = vsel %vm1134, %v1115, %v1117
        %v1139 = vsel %vm1134, %v1119, %v1121
        %v1140 = vsel %vm1134, %v1123, %v1125
        %v1141 = vsel %vm1134, %v1127, %v1129
        %v1142 = vsel %vm1134, %v1131, %v1133
        %v1151 = vadd.f32 %v1014, %v1135
        %v1152 = vadd.f32 %v1015, %v1136
        %v1153 = vadd.f32 %v1016, %v1137
        %v1154 = vadd.f32 %v1017, %v1138
        %v1155 = vadd.f32 %v1018, %v1139
        %v1156 = vadd.f32 %v1019, %v1140
        %v1157 = vadd.f32 %v1020, %v1141
        %v1158 = vadd.f32 %v1021, %v1142
        %1159 = vset.pattern.permute.xlu0 2
        %1160 = vperm.xlu0 %1159, %v958
        %v1161 = vpop.permute.xlu0 %1160
        %1163 = vset.pattern.permute.xlu0 2
        %1164 = vperm.xlu0 %1163, %v959
        %v1165 = vpop.permute.xlu0 %1164
        %1167 = vset.pattern.permute.xlu0 2
        %1168 = vperm.xlu0 %1167, %v960
        %v1169 = vpop.permute.xlu0 %1168
        %1171 = vset.pattern.permute.xlu0 2
        %1172 = vperm.xlu0 %1171, %v961
        %v1173 = vpop.permute.xlu0 %1172
        %1175 = vset.pattern.permute.xlu0 2
        %1176 = vperm.xlu0 %1175, %v962
        %v1177 = vpop.permute.xlu0 %1176
        %1179 = vset.pattern.permute.xlu0 2
        %1180 = vperm.xlu0 %1179, %v963
        %v1181 = vpop.permute.xlu0 %1180
        %1183 = vset.pattern.permute.xlu0 2
        %1184 = vperm.xlu0 %1183, %v964
        %v1185 = vpop.permute.xlu0 %1184
        %1187 = vset.pattern.permute.xlu0 2
        %1188 = vperm.xlu0 %1187, %v965
        %v1189 = vpop.permute.xlu0 %1188
        %v1191 = vmul.f32 %v1161, %v1022
        %v1192 = vmul.f32 %v1161, %v1023
        %v1193 = vmul.f32 %v1165, %v1024
        %v1194 = vmul.f32 %v1165, %v1025
        %v1195 = vmul.f32 %v1169, %v1026
        %v1196 = vmul.f32 %v1169, %v1027
        %v1197 = vmul.f32 %v1173, %v1028
        %v1198 = vmul.f32 %v1173, %v1029
        %v1199 = vmul.f32 %v1177, %v1030
        %v1200 = vmul.f32 %v1177, %v1031
        %v1201 = vmul.f32 %v1181, %v1032
        %v1202 = vmul.f32 %v1181, %v1033
        %v1203 = vmul.f32 %v1185, %v1034
        %v1204 = vmul.f32 %v1185, %v1035
        %v1205 = vmul.f32 %v1189, %v1036
        %v1206 = vmul.f32 %v1189, %v1037
        %1223 = vrot.lane.b32.xlu0 %v1191, 126
        %v1224 = vpop.permute.xlu0 %1223
        %1225 = vrot.lane.b32.xlu0 %v1192, 126
        %v1226 = vpop.permute.xlu0 %1225
        %1227 = vrot.lane.b32.xlu0 %v1193, 126
        %v1228 = vpop.permute.xlu0 %1227
        %1229 = vrot.lane.b32.xlu0 %v1194, 126
        %v1230 = vpop.permute.xlu0 %1229
        %1231 = vrot.lane.b32.xlu0 %v1195, 126
        %v1232 = vpop.permute.xlu0 %1231
        %1233 = vrot.lane.b32.xlu0 %v1196, 126
        %v1234 = vpop.permute.xlu0 %1233
        %1235 = vrot.lane.b32.xlu0 %v1197, 126
        %v1236 = vpop.permute.xlu0 %1235
        %1237 = vrot.lane.b32.xlu0 %v1198, 126
        %v1238 = vpop.permute.xlu0 %1237
        %1239 = vrot.lane.b32.xlu0 %v1199, 126
        %v1240 = vpop.permute.xlu0 %1239
        %1241 = vrot.lane.b32.xlu0 %v1200, 126
        %v1242 = vpop.permute.xlu0 %1241
        %1243 = vrot.lane.b32.xlu0 %v1201, 126
        %v1244 = vpop.permute.xlu0 %1243
        %1245 = vrot.lane.b32.xlu0 %v1202, 126
        %v1246 = vpop.permute.xlu0 %1245
        %1247 = vrot.lane.b32.xlu0 %v1203, 126
        %v1248 = vpop.permute.xlu0 %1247
        %1249 = vrot.lane.b32.xlu0 %v1204, 126
        %v1250 = vpop.permute.xlu0 %1249
        %1251 = vrot.lane.b32.xlu0 %v1205, 126
        %v1252 = vpop.permute.xlu0 %1251
        %1253 = vrot.lane.b32.xlu0 %v1206, 126
        %v1254 = vpop.permute.xlu0 %1253
        %vm1255 = vcmask 1031168
        %v1256 = vsel %vm1255, %v1224, %v1226
        %v1257 = vsel %vm1255, %v1228, %v1230
        %v1258 = vsel %vm1255, %v1232, %v1234
        %v1259 = vsel %vm1255, %v1236, %v1238
        %v1260 = vsel %vm1255, %v1240, %v1242
        %v1261 = vsel %vm1255, %v1244, %v1246
        %v1262 = vsel %vm1255, %v1248, %v1250
        %v1263 = vsel %vm1255, %v1252, %v1254
        %v1272 = vadd.f32 %v1151, %v1256
        %v1273 = vadd.f32 %v1152, %v1257
        %v1274 = vadd.f32 %v1153, %v1258
        %v1275 = vadd.f32 %v1154, %v1259
        %v1276 = vadd.f32 %v1155, %v1260
        %v1277 = vadd.f32 %v1156, %v1261
        %v1278 = vadd.f32 %v1157, %v1262
        %v1279 = vadd.f32 %v1158, %v1263
        %v1280 = vld [vmem:[%s7] sm:$0xff]
        %v1281 = vld [vmem:[%s7 + $0x8] sm:$0xff]
        %v1282 = vld [vmem:[%s7 + $0x10] sm:$0xff]
        %v1283 = vld [vmem:[%s7 + $0x18] sm:$0xff]
        %v1284 = vld [vmem:[%s7 + $0x20] sm:$0xff]
        %v1285 = vld [vmem:[%s7 + $0x28] sm:$0xff]
        %v1286 = vld [vmem:[%s7 + $0x30] sm:$0xff]
        %v1287 = vld [vmem:[%s7 + $0x38] sm:$0xff]
        %1289 = vset.pattern.permute.xlu0 0
        %1290 = vperm.xlu0 %1289, %v1280
        %v1291 = vpop.permute.xlu0 %1290
        %1294 = vset.pattern.permute.xlu0 0
        %1295 = vperm.xlu0 %1294, %v1281
        %v1296 = vpop.permute.xlu0 %1295
        %1299 = vset.pattern.permute.xlu0 0
        %1300 = vperm.xlu0 %1299, %v1282
        %v1301 = vpop.permute.xlu0 %1300
        %1304 = vset.pattern.permute.xlu0 0
        %1305 = vperm.xlu0 %1304, %v1283
        %v1306 = vpop.permute.xlu0 %1305
        %1309 = vset.pattern.permute.xlu0 0
        %1310 = vperm.xlu0 %1309, %v1284
        %v1311 = vpop.permute.xlu0 %1310
        %1314 = vset.pattern.permute.xlu0 0
        %1315 = vperm.xlu0 %1314, %v1285
        %v1316 = vpop.permute.xlu0 %1315
        %1319 = vset.pattern.permute.xlu0 0
        %1320 = vperm.xlu0 %1319, %v1286
        %v1321 = vpop.permute.xlu0 %1320
        %1324 = vset.pattern.permute.xlu0 0
        %1325 = vperm.xlu0 %1324, %v1287
        %v1326 = vpop.permute.xlu0 %1325
        %v1328 = vadd.f32 %v1272, %v1291
        %v1329 = vadd.f32 %v1273, %v1296
        %v1330 = vadd.f32 %v1274, %v1301
        %v1331 = vadd.f32 %v1275, %v1306
        %v1332 = vadd.f32 %v1276, %v1311
        %v1333 = vadd.f32 %v1277, %v1316
        %v1334 = vadd.f32 %v1278, %v1321
        %v1335 = vadd.f32 %v1279, %v1326
        %vm1336 = vcmp.ge.f32.partialorder %v1328, 0.0
        %vm1337 = vcmp.ge.f32.partialorder %v1329, 0.0
        %vm1338 = vcmp.ge.f32.partialorder %v1330, 0.0
        %vm1339 = vcmp.ge.f32.partialorder %v1331, 0.0
        %vm1340 = vcmp.ge.f32.partialorder %v1332, 0.0
        %vm1341 = vcmp.ge.f32.partialorder %v1333, 0.0
        %vm1342 = vcmp.ge.f32.partialorder %v1334, 0.0
        %vm1343 = vcmp.ge.f32.partialorder %v1335, 0.0
        %v1344 = vld [vmem:[#allocation4] sm:$0x1]
        %v1346 = vlaneseq
        %v1347 = vshrl.u32 %v1346, 7
        %v1348 = vsub.s32 0, %v1347
        %v1349 = vrot.slane %v1344, %v1348
        %1350 = vset.pattern.permute.xlu0 0
        %1351 = vperm.xlu0 %1350, %v1349
        %v1352 = vpop.permute.xlu0 %1351
        %v1354 = vmul.f32 %v1352, %v1328
        %v1355 = vmul.f32 %v1352, %v1329
        %v1356 = vmul.f32 %v1352, %v1330
        %v1357 = vmul.f32 %v1352, %v1331
        %v1358 = vmul.f32 %v1352, %v1332
        %v1359 = vmul.f32 %v1352, %v1333
        %v1360 = vmul.f32 %v1352, %v1334
        %v1361 = vmul.f32 %v1352, %v1335
        %v1362 = vsel %vm1336, %v1328, %v1354
        %v1363 = vsel %vm1337, %v1329, %v1355
        %v1364 = vsel %vm1338, %v1330, %v1356
        %v1365 = vsel %vm1339, %v1331, %v1357
        %v1366 = vsel %vm1340, %v1332, %v1358
        %v1367 = vsel %vm1341, %v1333, %v1359
        %v1368 = vsel %vm1342, %v1334, %v1360
        %v1369 = vsel %vm1343, %v1335, %v1361
        %v1370 = vadd.f32 %v1362, %v1363
        %v1371 = vadd.f32 %v1370, %v1364
        %v1372 = vadd.f32 %v1371, %v1365
        %v1373 = vadd.f32 %v1372, %v1366
        %v1374 = vadd.f32 %v1373, %v1367
        %v1375 = vadd.f32 %v1374, %v1368
        %v1376 = vadd.f32 %v1375, %v1369
        %1377 = vadd.xlane.f32.xlu0 %v1376
        %v1378 = vpop.xlane.xlu0 %1377
        %v1379 = vrot.slane %v1378, 4
        %v1380 = vadd.f32 %v1378, %v1379
        %v1381 = vrot.slane %v1380, 2
        %v1382 = vadd.f32 %v1380, %v1381
        %v1383 = vrot.slane %v1382, 1
        %v1384 = vadd.f32 %v1382, %v1383
        %s1385 = vtos %v1384
        %v1386 = vmul.f32 %v1362, %v1362
        %v1387 = vmul.f32 %v1363, %v1363
        %v1388 = vmul.f32 %v1364, %v1364
        %v1389 = vmul.f32 %v1365, %v1365
        %v1390 = vmul.f32 %v1366, %v1366
        %v1391 = vmul.f32 %v1367, %v1367
        %v1392 = vmul.f32 %v1368, %v1368
        %v1393 = vmul.f32 %v1369, %v1369
        %v1394 = vadd.f32 %v1386, %v1387
        %v1395 = vadd.f32 %v1394, %v1388
        %v1396 = vadd.f32 %v1395, %v1389
        %v1397 = vadd.f32 %v1396, %v1390
        %v1398 = vadd.f32 %v1397, %v1391
        %v1399 = vadd.f32 %v1398, %v1392
        %v1400 = vadd.f32 %v1399, %v1393
        %1401 = vadd.xlane.f32.xlu0 %v1400
        %v1402 = vpop.xlane.xlu0 %1401
        %v1403 = vrot.slane %v1402, 4
        %v1404 = vadd.f32 %v1402, %v1403
        %v1405 = vrot.slane %v1404, 2
        %v1406 = vadd.f32 %v1404, %v1405
        %v1407 = vrot.slane %v1406, 1
        %v1408 = vadd.f32 %v1406, %v1407
        %s1409 = vtos %v1408
        %s1410 = smul.f32 %s1385, 0.00012207031
        %s1411 = smul.f32 %s1409, 0.00012207031
        %s1412 = smul.f32 %s1410, %s1410
        %s1413 = ssub.f32 %s1411, %s1412
        %v1414 = vld [vmem:[%s9] sm:$0xff]
        %v1415 = vld [vmem:[%s9 + $0x8] sm:$0xff]
        %v1416 = vld [vmem:[%s9 + $0x10] sm:$0xff]
        %v1417 = vld [vmem:[%s9 + $0x18] sm:$0xff]
        %v1418 = vld [vmem:[%s9 + $0x20] sm:$0xff]
        %v1419 = vld [vmem:[%s9 + $0x28] sm:$0xff]
        %v1420 = vld [vmem:[%s9 + $0x30] sm:$0xff]
        %v1421 = vld [vmem:[%s9 + $0x38] sm:$0xff]
        %s1422 = sadd.f32 %s1413, 1e-08
        %v1423 = vstv %s1422
        %v1424 = vrsqrt.pop %v1423
        %s1425 = vtos %v1424
        %v1426 = vstv %s1425
        %v1427 = vmul.f32 %v1414, %v1426
        %v1428 = vmul.f32 %v1415, %v1426
        %v1429 = vmul.f32 %v1416, %v1426
        %v1430 = vmul.f32 %v1417, %v1426
        %v1431 = vmul.f32 %v1418, %v1426
        %v1432 = vmul.f32 %v1419, %v1426
        %v1433 = vmul.f32 %v1420, %v1426
        %v1434 = vmul.f32 %v1421, %v1426
        %v1435 = vld [vmem:[%s10] sm:$0xff]
        %v1436 = vld [vmem:[%s10 + $0x8] sm:$0xff]
        %v1437 = vld [vmem:[%s10 + $0x10] sm:$0xff]
        %v1438 = vld [vmem:[%s10 + $0x18] sm:$0xff]
        %v1439 = vld [vmem:[%s10 + $0x20] sm:$0xff]
        %v1440 = vld [vmem:[%s10 + $0x28] sm:$0xff]
        %v1441 = vld [vmem:[%s10 + $0x30] sm:$0xff]
        %v1442 = vld [vmem:[%s10 + $0x38] sm:$0xff]
        %v1443 = vstv %s1410
        %v1444 = vmul.f32 %v1443, %v1427
        %v1445 = vmul.f32 %v1443, %v1428
        %v1446 = vmul.f32 %v1443, %v1429
        %v1447 = vmul.f32 %v1443, %v1430
        %v1448 = vmul.f32 %v1443, %v1431
        %v1449 = vmul.f32 %v1443, %v1432
        %v1450 = vmul.f32 %v1443, %v1433
        %v1451 = vmul.f32 %v1443, %v1434
        %v1452 = vsub.f32 %v1435, %v1444
        %v1453 = vsub.f32 %v1436, %v1445
        %v1454 = vsub.f32 %v1437, %v1446
        %v1455 = vsub.f32 %v1438, %v1447
        %v1456 = vsub.f32 %v1439, %v1448
        %v1457 = vsub.f32 %v1440, %v1449
        %v1458 = vsub.f32 %v1441, %v1450
        %v1459 = vsub.f32 %v1442, %v1451
        %1461 = vset.pattern.permute.xlu0 0
        %1462 = vperm.xlu0 %1461, %v1427
        %v1463 = vpop.permute.xlu0 %1462
        %1466 = vset.pattern.permute.xlu0 0
        %1467 = vperm.xlu0 %1466, %v1428
        %v1468 = vpop.permute.xlu0 %1467
        %1471 = vset.pattern.permute.xlu0 0
        %1472 = vperm.xlu0 %1471, %v1429
        %v1473 = vpop.permute.xlu0 %1472
        %1476 = vset.pattern.permute.xlu0 0
        %1477 = vperm.xlu0 %1476, %v1430
        %v1478 = vpop.permute.xlu0 %1477
        %1481 = vset.pattern.permute.xlu0 0
        %1482 = vperm.xlu0 %1481, %v1431
        %v1483 = vpop.permute.xlu0 %1482
        %1486 = vset.pattern.permute.xlu0 0
        %1487 = vperm.xlu0 %1486, %v1432
        %v1488 = vpop.permute.xlu0 %1487
        %1491 = vset.pattern.permute.xlu0 0
        %1492 = vperm.xlu0 %1491, %v1433
        %v1493 = vpop.permute.xlu0 %1492
        %1496 = vset.pattern.permute.xlu0 0
        %1497 = vperm.xlu0 %1496, %v1434
        %v1498 = vpop.permute.xlu0 %1497
        %v1500 = vmul.f32 %v1362, %v1463
        %v1501 = vmul.f32 %v1363, %v1468
        %v1502 = vmul.f32 %v1364, %v1473
        %v1503 = vmul.f32 %v1365, %v1478
        %v1504 = vmul.f32 %v1366, %v1483
        %v1505 = vmul.f32 %v1367, %v1488
        %v1506 = vmul.f32 %v1368, %v1493
        %v1507 = vmul.f32 %v1369, %v1498
        %1509 = vset.pattern.permute.xlu0 0
        %1510 = vperm.xlu0 %1509, %v1452
        %v1511 = vpop.permute.xlu0 %1510
        %1514 = vset.pattern.permute.xlu0 0
        %1515 = vperm.xlu0 %1514, %v1453
        %v1516 = vpop.permute.xlu0 %1515
        %1519 = vset.pattern.permute.xlu0 0
        %1520 = vperm.xlu0 %1519, %v1454
        %v1521 = vpop.permute.xlu0 %1520
        %1524 = vset.pattern.permute.xlu0 0
        %1525 = vperm.xlu0 %1524, %v1455
        %v1526 = vpop.permute.xlu0 %1525
        %1529 = vset.pattern.permute.xlu0 0
        %1530 = vperm.xlu0 %1529, %v1456
        %v1531 = vpop.permute.xlu0 %1530
        %1534 = vset.pattern.permute.xlu0 0
        %1535 = vperm.xlu0 %1534, %v1457
        %v1536 = vpop.permute.xlu0 %1535
        %1539 = vset.pattern.permute.xlu0 0
        %1540 = vperm.xlu0 %1539, %v1458
        %v1541 = vpop.permute.xlu0 %1540
        %1544 = vset.pattern.permute.xlu0 0
        %1545 = vperm.xlu0 %1544, %v1459
        %v1546 = vpop.permute.xlu0 %1545
        %v1548 = vadd.f32 %v1500, %v1511
        %v1549 = vadd.f32 %v1501, %v1516
        %v1550 = vadd.f32 %v1502, %v1521
        %v1551 = vadd.f32 %v1503, %v1526
        %v1552 = vadd.f32 %v1504, %v1531
        %v1553 = vadd.f32 %v1505, %v1536
        %v1554 = vadd.f32 %v1506, %v1541
        %v1555 = vadd.f32 %v1507, %v1546
        %v1556 = vld [vmem:[%s11] sm:$0xff]
        %v1557 = vld [vmem:[%s11 + $0x8] sm:$0xff]
        %v1558 = vld [vmem:[%s11 + $0x10] sm:$0xff]
        %v1559 = vld [vmem:[%s11 + $0x18] sm:$0xff]
        %v1560 = vld [vmem:[%s11 + $0x20] sm:$0xff]
        %v1561 = vld [vmem:[%s11 + $0x28] sm:$0xff]
        %v1562 = vld [vmem:[%s11 + $0x30] sm:$0xff]
        %v1563 = vld [vmem:[%s11 + $0x38] sm:$0xff]
        %v1564 = vld [vmem:[%s12] sm:$0xff]
        %v1565 = vld [vmem:[%s12 + $0x8] sm:$0xff]
        %v1566 = vld [vmem:[%s12 + $0x10] sm:$0xff]
        %v1567 = vld [vmem:[%s12 + $0x18] sm:$0xff]
        %v1568 = vld [vmem:[%s12 + $0x20] sm:$0xff]
        %v1569 = vld [vmem:[%s12 + $0x28] sm:$0xff]
        %v1570 = vld [vmem:[%s12 + $0x30] sm:$0xff]
        %v1571 = vld [vmem:[%s12 + $0x38] sm:$0xff]
        %1573 = vset.pattern.permute.xlu0 0
        %1574 = vperm.xlu0 %1573, %v1564
        %v1575 = vpop.permute.xlu0 %1574
        %1578 = vset.pattern.permute.xlu0 0
        %1579 = vperm.xlu0 %1578, %v1565
        %v1580 = vpop.permute.xlu0 %1579
        %1583 = vset.pattern.permute.xlu0 0
        %1584 = vperm.xlu0 %1583, %v1566
        %v1585 = vpop.permute.xlu0 %1584
        %1588 = vset.pattern.permute.xlu0 0
        %1589 = vperm.xlu0 %1588, %v1567
        %v1590 = vpop.permute.xlu0 %1589
        %1593 = vset.pattern.permute.xlu0 0
        %1594 = vperm.xlu0 %1593, %v1568
        %v1595 = vpop.permute.xlu0 %1594
        %1598 = vset.pattern.permute.xlu0 0
        %1599 = vperm.xlu0 %1598, %v1569
        %v1600 = vpop.permute.xlu0 %1599
        %1603 = vset.pattern.permute.xlu0 0
        %1604 = vperm.xlu0 %1603, %v1570
        %v1605 = vpop.permute.xlu0 %1604
        %1608 = vset.pattern.permute.xlu0 0
        %1609 = vperm.xlu0 %1608, %v1571
        %v1610 = vpop.permute.xlu0 %1609
        %vm1612 = vcmask 523264
        %v1614 = vsel %vm1612, %v1556, 0
        %v1617 = vsel %vm1612, %v1557, 0
        %v1620 = vsel %vm1612, %v1558, 0
        %v1623 = vsel %vm1612, %v1559, 0
        %v1626 = vsel %vm1612, %v1560, 0
        %v1629 = vsel %vm1612, %v1561, 0
        %v1632 = vsel %vm1612, %v1562, 0
        %v1635 = vsel %vm1612, %v1563, 0
        %1637 = vmatprep.subr.mxu0 0.0
        %1638 = vmatpush1.msra.mxu0 %v1548
        %1639 = vmatprep.subr.mxu0 0.0
        %1640 = vmatpush1.msra.mxu0 %v1549
        %1641 = vmatprep.subr.mxu0 0.0
        %1642 = vmatpush1.msra.mxu0 %v1550
        %1643 = vmatprep.subr.mxu0 0.0
        %1644 = vmatpush1.msra.mxu0 %v1551
        %1645 = vmatprep.subr.mxu0 0.0
        %1646 = vmatpush1.msra.mxu0 %v1552
        %1647 = vmatprep.subr.mxu0 0.0
        %1648 = vmatpush1.msra.mxu0 %v1553
        %1649 = vmatprep.subr.mxu0 0.0
        %1650 = vmatpush1.msra.mxu0 %v1554
        %1651 = vmatprep.subr.mxu0 0.0
        %1652 = vmatpush1.msra.mxu0 %v1555
        %1653 = vmatprep.subr.mxu0 0.0
        %1654 = vmatpush1.msra.mxu0 0.0
        %1655 = vmatprep.subr.mxu0 0.0
        %1656 = vmatpush1.msra.mxu0 0.0
        %1657 = vmatprep.subr.mxu0 0.0
        %1658 = vmatpush1.msra.mxu0 0.0
        %1659 = vmatprep.subr.mxu0 0.0
        %1660 = vmatpush1.msra.mxu0 0.0
        %1661 = vmatprep.subr.mxu0 0.0
        %1662 = vmatpush1.msra.mxu0 0.0
        %1663 = vmatprep.subr.mxu0 0.0
        %1664 = vmatpush1.msra.mxu0 0.0
        %1665 = vmatprep.subr.mxu0 0.0
        %1666 = vmatpush1.msra.mxu0 0.0
        %1667 = vmatprep.subr.mxu0 0.0
        %1668 = vmatpush1.msra.mxu0 0.0
        %1669 = vmatprep.subr.mxu0 0.0
        %1670 = vmatpush1.msra.mxu0 0.0
        %1671 = vmatprep.subr.mxu0 0.0
        %1672 = vmatpush1.msra.mxu0 0.0
        %1673 = vmatprep.subr.mxu0 0.0
        %1674 = vmatpush1.msra.mxu0 0.0
        %1675 = vmatprep.subr.mxu0 0.0
        %1676 = vmatpush1.msra.mxu0 0.0
        %1677 = vmatprep.subr.mxu0 0.0
        %1678 = vmatpush1.msra.mxu0 0.0
        %1679 = vmatprep.subr.mxu0 0.0
        %1680 = vmatpush1.msra.mxu0 0.0
        %1681 = vmatprep.subr.mxu0 0.0
        %1682 = vmatpush1.msra.mxu0 0.0
        %1683 = vmatprep.subr.mxu0 0.0
        %1684 = vmatpush1.msra.mxu0 0.0
        %1685 = vmatprep.subr.mxu0 0.0
        %1686 = vmatpush1.msra.mxu0 0.0
        %1687 = vmatprep.subr.mxu0 0.0
        %1688 = vmatpush1.msra.mxu0 0.0
        %1689 = vmatprep.subr.mxu0 0.0
        %1690 = vmatpush1.msra.mxu0 0.0
        %1691 = vmatprep.subr.mxu0 0.0
        %1692 = vmatpush1.msra.mxu0 0.0
        %1693 = vmatprep.subr.mxu0 0.0
        %1694 = vmatpush1.msra.mxu0 0.0
        %1695 = vmatprep.subr.mxu0 0.0
        %1696 = vmatpush1.msra.mxu0 0.0
        %1697 = vmatprep.subr.mxu0 0.0
        %1698 = vmatpush1.msra.mxu0 0.0
        %1699 = vmatprep.subr.mxu0 0.0
        %1700 = vmatpush1.msra.mxu0 0.0
        %1701 = vmatprep.mubr.f32.mxu0 0.0
        %1702 = vmatmul.mubr.f32.gmra.mrb[0].mxu0 %v1614
        %v1703 = vpop.f32.mrb[0].mxu0
        %v1704 = vadd.f32 %v1575, %v1703
        %v1705 = vpop.f32.mrb[0].mxu0
        %1706 = vmatprep.mubr.f32.mxu0 0.0
        %1707 = vmatmul.mubr.f32.gmra.mrb[0].mxu0 %v1617
        %v1708 = vpop.f32.mrb[0].mxu0
        %v1709 = vadd.f32 %v1580, %v1708
        %v1710 = vpop.f32.mrb[0].mxu0
        %1711 = vmatprep.mubr.f32.mxu0 0.0
        %1712 = vmatmul.mubr.f32.gmra.mrb[0].mxu0 %v1620
        %v1713 = vpop.f32.mrb[0].mxu0
        %v1714 = vadd.f32 %v1585, %v1713
        %v1715 = vpop.f32.mrb[0].mxu0
        %1716 = vmatprep.mubr.f32.mxu0 0.0
        %1717 = vmatmul.mubr.f32.gmra.mrb[0].mxu0 %v1623
        %v1718 = vpop.f32.mrb[0].mxu0
        %v1719 = vadd.f32 %v1590, %v1718
        %v1720 = vpop.f32.mrb[0].mxu0
        %1721 = vmatprep.mubr.f32.mxu0 0.0
        %1722 = vmatmul.mubr.f32.gmra.mrb[0].mxu0 %v1626
        %v1723 = vpop.f32.mrb[0].mxu0
        %v1724 = vadd.f32 %v1595, %v1723
        %v1725 = vpop.f32.mrb[0].mxu0
        %1726 = vmatprep.mubr.f32.mxu0 0.0
        %1727 = vmatmul.mubr.f32.gmra.mrb[0].mxu0 %v1629
        %v1728 = vpop.f32.mrb[0].mxu0
        %v1729 = vadd.f32 %v1600, %v1728
        %v1730 = vpop.f32.mrb[0].mxu0
        %1731 = vmatprep.mubr.f32.mxu0 0.0
        %1732 = vmatmul.mubr.f32.gmra.mrb[0].mxu0 %v1632
        %v1733 = vpop.f32.mrb[0].mxu0
        %v1734 = vadd.f32 %v1605, %v1733
        %v1735 = vpop.f32.mrb[0].mxu0
        %1736 = vmatprep.mubr.f32.mxu0 0.0
        %1737 = vmatmul.mubr.f32.gmra.mrb[0].mxu0 %v1635
        %v1738 = vpop.f32.mrb[0].mxu0
        %v1739 = vadd.f32 %v1610, %v1738
        %v1740 = vpop.f32.mrb[0].mxu0
        %1741 = vdwg.mxu0
        %1742 = vst [vmem:[%s468] sm:$0xff] %v1704
        %1743 = vst [vmem:[%s468 + $0x8] sm:$0xff] %v1709
        %1744 = vst [vmem:[%s468 + $0x10] sm:$0xff] %v1714
        %1745 = vst [vmem:[%s468 + $0x18] sm:$0xff] %v1719
        %1746 = vst [vmem:[%s475] sm:$0xff] %v1724
        %1747 = vst [vmem:[%s475 + $0x8] sm:$0xff] %v1729
        %1748 = vst [vmem:[%s475 + $0x10] sm:$0xff] %v1734
        %1749 = vst [vmem:[%s475 + $0x18] sm:$0xff] %v1739
        %s1750 = sand.u32 %s322, 1
        %s1751 = scalar_lea.sflag [#allocation6], %s1750
        %s1752 = sand.u32 %s322, 1
        %s1753 = smul.addr %s1752, 32
        %s1754 = scalar_lea.vmem [#allocation5], %s1753
        %s1755 = sand.u32 %s348, 1
        %s1756 = scalar_lea.sflag [#allocation8], %s1755
        %s1757 = sand.u32 %s348, 1
        %s1758 = smul.addr %s1757, 32
        %s1759 = scalar_lea.vmem [#allocation7], %s1758
        // Predicated region
        $region73: #{depth_conv1d_forward.1} parent=71 // pred_check
          %p1760 = pneg %p332
        $region74: #{depth_conv1d_forward.1} parent=71 // pred_check_branch
          %1762 = sbr.rel (%p1760) target = $region76
        $region75: #{depth_conv1d_forward.1} parent=71 // pred_region
          %s1764 = ssub.s32 512, 512
          %1765 = vsyncadd %s1751, %s1764
          %s1766 = smul.addr %s36, 4
          %s1767 = smul.addr %s1766, 128
          %s1768 = scalar_lea.hbm %s13, %s1767
          %s1769 = sshll.u32 %s1754, 4
          %s1770 = int_to_ptr.vmem [resolvable:$true] %s1769
          %1775 = dma.vmem_to_hbm [thread:$0]  %s1770, 512, %s1768, %s1751, 128, 128, 8
        $region76: #{depth_conv1d_forward.1} parent=71 // pred_fallthru
          _
        // Predicated region
        $region77: #{depth_conv1d_forward.1} parent=71 // pred_check
          %p1776 = pneg %p358
        $region78: #{depth_conv1d_forward.1} parent=71 // pred_check_branch
          %1778 = sbr.rel (%p1776) target = $region80
        $region79: #{depth_conv1d_forward.1} parent=71 // pred_region
          %s1780 = ssub.s32 512, 512
          %1781 = vsyncadd %s1756, %s1780
          %s1782 = smul.addr %s36, 4
          %s1783 = smul.addr %s1782, 128
          %s1784 = scalar_lea.hbm %s14, %s1783
          %s1785 = sshll.u32 %s1759, 4
          %s1786 = int_to_ptr.vmem [resolvable:$true] %s1785
          %1791 = dma.vmem_to_hbm [thread:$0]  %s1786, 512, %s1784, %s1756, 128, 128, 8
        $region80: #{depth_conv1d_forward.1} parent=71 // pred_fallthru
          _
      $region72: #{depth_conv1d_forward.1} parent=5 // pred_fallthru
        _
      %p1792 = scmp.le.s32.totalorder 2, %s31
      // Predicated region
      $region81: #{depth_conv1d_forward.1} parent=5 // pred_check
        %p1793 = pneg %p1792
      $region82: #{depth_conv1d_forward.1} parent=5 // pred_check_branch
        %1795 = sbr.rel (%p1793) target = $region84
      $region83: #{depth_conv1d_forward.1} parent=5 // pred_region
        %s1796 = ssub.s32 %s31, 2
        // Predicated region
        $region85: #{depth_conv1d_forward.1} parent=83 // pred_check
          %p1797 = pneg %p338
        $region86: #{depth_conv1d_forward.1} parent=83 // pred_check_branch
          %1799 = sbr.rel (%p1797) target = $region88
        $region87: #{depth_conv1d_forward.1} parent=83 // pred_region
          %s1800 = sand.u32 %s323, 1
          %s1801 = scalar_lea.sflag [#allocation6], %s1800
          %s1802 = sand.u32 %s323, 1
          %s1803 = smul.addr %s1802, 32
          %s1804 = scalar_lea.vmem [#allocation5], %s1803
          %1805 = dma.done %s1801, 512
        $region88: #{depth_conv1d_forward.1} parent=83 // pred_fallthru
          _
        // Predicated region
        $region89: #{depth_conv1d_forward.1} parent=83 // pred_check
          %p1806 = pneg %p364
        $region90: #{depth_conv1d_forward.1} parent=83 // pred_check_branch
          %1808 = sbr.rel (%p1806) target = $region92
        $region91: #{depth_conv1d_forward.1} parent=83 // pred_region
          %s1809 = sand.u32 %s349, 1
          %s1810 = scalar_lea.sflag [#allocation8], %s1809
          %s1811 = sand.u32 %s349, 1
          %s1812 = smul.addr %s1811, 32
          %s1813 = scalar_lea.vmem [#allocation7], %s1812
          %1814 = dma.done %s1810, 512
        $region92: #{depth_conv1d_forward.1} parent=83 // pred_fallthru
          _
      $region84: #{depth_conv1d_forward.1} parent=5 // pred_fallthru
        _
    $region6: #{depth_conv1d_forward.1} parent=1 // loop_footer
      %s35 = sadd.s32 1, %s31
    $region7: #{depth_conv1d_forward.1} parent=1 // loop_footer_branch
      %30 = sbr.rel target = $region3
    $region8: #{depth_conv1d_forward.1} parent=1 // loop_exit
      _
    %1815 = vsyncpa [#allocation6], 1
    %s1816 = scalar_lea.sflag [#allocation6], 1
    %1817 = vsyncpa %s1816, 1
    %1818 = vsyncpa [#allocation8], 1
    %s1819 = scalar_lea.sflag [#allocation8], 1
    %1820 = vsyncpa %s1819, 1

</llo_original>
